<compile_context>
chip_gen: v7x
topology: tpu7x:2x2x1
jax: 0.10.0
libtpu: 0.0.40
codegen_flags: <defaults>
</compile_context>

<pallas_src>
import jax
import jax.numpy as jnp
from jax.experimental import pallas as pl
from jax.experimental.pallas import tpu as pltpu

# NOTE: multiplying by a precomputed 1/255 differs from torchvision's
# divide-by-255 by at most 1 ulp in float32 (1/255 is not exactly
# representable); well within the tolerance used downstream.
_SCALE_U8 = 1.0 / float(jnp.iinfo(jnp.uint8).max)  # 1/255

# Widest-first lane-dense slab widths (all multiples of 128).
_LANE_CANDIDATES = (8192, 4096, 2048, 1024, 512, 256, 128)

# ~2 Mi elements per grid step: 2 MiB u8 in + 8 MiB f32 out = ~10 MiB / step.
# Double-buffered VMEM footprint ~= 2 * 5 B * 2 Mi = ~20 MiB.
_TARGET_ELEMS_PER_STEP = 2 * 1024 * 1024

# v5e default scoped VMEM is 16 MiB (vs 128 MiB physical); raise explicitly.
# 48 MiB also fits comfortably under v7x's 64 MiB physical VMEM.
_VMEM_LIMIT_BYTES = 48 * 1024 * 1024

# Below this, a fused XLA convert beats the pallas_call launch + single-step
# pipeline overhead.
_SMALL_FASTPATH_ELEMS = 64 * 1024


def _convert_kernel(x_ref, o_ref, *, scale):
    # Elementwise hot path: uint8 -> float32 cast + normalize (pure VPU work,
    # kernel is HBM-bandwidth bound).
    o_ref[...] = x_ref[...].astype(jnp.float32) * scale


def _pick_lane_width(total: int):
    """Widest lane dim that divides `total` exactly and leaves >= 8 rows."""
    for w in _LANE_CANDIDATES:
        if total % w == 0 and total // w >= 8:
            return w
    return None


def _pick_tile_rows(rows: int, cols: int) -> int:
    """Largest row tile (multiple of 32, the u8 sublane pack) hitting the
    per-step byte target; full `rows` if the whole slab fits in one step."""
    target = max(_TARGET_ELEMS_PER_STEP // cols, 32)
    if rows <= target:
        return rows  # block == full dim is always legal
    return max((target // 32) * 32, 32)


def _convert_2d(x2d: jax.Array, scale: float) -> jax.Array:
    rows, cols = x2d.shape
    tile_r = _pick_tile_rows(rows, cols)
    grid = (pl.cdiv(rows, tile_r),)
    # TODO(synk): if a v7x profile shows only one TensorCore busy, switch the
    # axis to pltpu.CORE_PARALLEL and keep an even number of grid steps.

    kernel = lambda x_ref, o_ref: _convert_kernel(x_ref, o_ref, scale=scale)
    return pl.pallas_call(
        kernel,
        out_shape=jax.ShapeDtypeStruct((rows, cols), jnp.float32),
        grid=grid,
        in_specs=[pl.BlockSpec((tile_r, cols), lambda i: (i, 0))],
        out_specs=pl.BlockSpec((tile_r, cols), lambda i: (i, 0)),
        compiler_params=pltpu.CompilerParams(
            dimension_semantics=("parallel",),
            vmem_limit_bytes=_VMEM_LIMIT_BYTES,
        ),
        cost_estimate=pl.CostEstimate(
            flops=rows * cols,
            transcendentals=0,
            bytes_accessed=5 * rows * cols,  # 1 B u8 read + 4 B f32 write
        ),
    )(x2d)


def convert_image_dtype(image: jax.Array, dtype=jnp.float32, target=None):
    """JAX/Pallas equivalent of ConvertImageDtype.forward for uint8 -> float32.

    Returns (converted_image, target) with target passed through unchanged.
    """
    if image.dtype != jnp.uint8 or dtype != jnp.float32:
        # TODO(synk): other convert_image_dtype pairs (float->int, int->int
        # rescaling) not implemented; this covers the common uint8->float32 path.
        raise NotImplementedError("only uint8 -> float32 implemented")

    orig_shape = image.shape
    total = image.size

    # Tiny inputs: fused XLA convert is faster than any pallas_call launch.
    if total < _SMALL_FASTPATH_ELEMS:
        return image.astype(jnp.float32) * _SCALE_U8, target

    flat = image.reshape(-1)  # reshape of contiguous array: no copy
    lane_w = _pick_lane_width(total)

    if lane_w is not None:
        out = _convert_2d(flat.reshape(-1, lane_w), _SCALE_U8).reshape(orig_shape)
    else:
        # Ragged element count: pad the cheap uint8 side (1 byte/elem) up to a
        # 128 multiple, run the kernel, then slice the f32 output. Avoids the
        # old f32 concatenate that re-materialized the whole output.
        padded = pl.cdiv(total, 128) * 128
        flat_p = jnp.pad(flat, (0, padded - total))
        lane_w = _pick_lane_width(padded)  # 128 always qualifies here
        out2d = _convert_2d(flat_p.reshape(-1, lane_w), _SCALE_U8)
        out = out2d.reshape(-1)[:total].reshape(orig_shape)

    return out, target


if __name__ == "__main__":
    key = jax.random.PRNGKey(0)
    k1, k2, k3 = jax.random.split(key, 3)
    target = {"labels": jnp.arange(4, dtype=jnp.int32)}

    # 1) Image-sized input -> Pallas kernel path (lane-dense slab, 2048 lanes).
    x_img = jax.random.randint(k1, (2, 3, 224, 224), 0, 256, dtype=jnp.int32).astype(
        jnp.uint8
    )
    out_img, tgt = convert_image_dtype(x_img, jnp.float32, target)
    out_img = jax.block_until_ready(out_img)
    ref_img = x_img.astype(jnp.float32) / 255.0
    assert out_img.shape == x_img.shape and out_img.dtype == jnp.float32
    assert jnp.allclose(out_img, ref_img, atol=1e-6)
    assert tgt is target

    # 2) Tiny input (2*4*16*16 = 2048 elems) -> small-size XLA fast path.
    x_small = jax.random.randint(k2, (2, 4, 16, 16), 0, 256, dtype=jnp.int32).astype(
        jnp.uint8
    )
    out_small, _ = convert_image_dtype(x_small, jnp.float32, None)
    out_small = jax.block_until_ready(out_small)
    assert out_small.dtype == jnp.float32
    assert jnp.allclose(out_small, x_small.astype(jnp.float32) / 255.0, atol=1e-6)

    # 3) Ragged element count -> pad-u8-and-slice path through the kernel.
    x_rag = jax.random.randint(k3, (2, 3, 113, 111), 0, 256, dtype=jnp.int32).astype(
        jnp.uint8
    )
    out_rag, _ = convert_image_dtype(x_rag, jnp.float32, None)
    out_rag = jax.block_until_ready(out_rag)
    assert out_rag.shape == x_rag.shape and out_rag.dtype == jnp.float32
    assert jnp.allclose(out_rag, x_rag.astype(jnp.float32) / 255.0, atol=1e-6)

    print("KERNEL_OK")
</pallas_src>

<mosaic_0001>
module attributes {stable_mosaic.version = 11 : i64} {
  func.func @_lambda_(%arg0: i32, %arg1: memref<147x2048xi8, #tpu.memory_space<vmem>>, %arg2: memref<147x2048xf32, #tpu.memory_space<vmem>>) attributes {dimension_semantics = [#tpu.dimension_semantics<parallel>], iteration_bounds = array<i64: 1>, scalar_prefetch = 0 : i64, scratch_operands = 0 : i64, tpu.core_type = #tpu.core_type<tc>, window_params = [{transform_indices = @transform_0, window_bounds = array<i64: 147, 2048>}, {transform_indices = @transform_1, window_bounds = array<i64: 147, 2048>}]} {
    %c0 = arith.constant 0 : index
    %c0_0 = arith.constant 0 : index
    %0 = vector.load %arg1[%c0, %c0_0] : memref<147x2048xi8, #tpu.memory_space<vmem>>, vector<147x2048xi8>
    %1 = arith.uitofp %0 : vector<147x2048xi8> to vector<147x2048xf32>
    %cst = arith.constant 0.00392156886 : f32
    %2 = vector.broadcast %cst : f32 to vector<147x2048xf32>
    %3 = arith.mulf %1, %2 : vector<147x2048xf32>
    %c0_1 = arith.constant 0 : index
    %c0_2 = arith.constant 0 : index
    %4 = vector.load %arg2[%c0_1, %c0_2] : memref<147x2048xf32, #tpu.memory_space<vmem>>, vector<147x2048xf32>
    tpu.vector_store %arg2[%c0_1, %c0_2], %3 {strides = array<i32>} : memref<147x2048xf32, #tpu.memory_space<vmem>>, vector<147x2048xf32>,
    return
  }
  func.func @transform_0(%arg0: i32) -> (i32, i32) {
    %c0_i32 = arith.constant 0 : i32
    %c0_i32_0 = arith.constant 0 : i32
    return %arg0, %c0_i32 : i32, i32
  }
  func.func @transform_1(%arg0: i32) -> (i32, i32) {
    %c0_i32 = arith.constant 0 : i32
    %c0_i32_0 = arith.constant 0 : i32
    return %arg0, %c0_i32 : i32, i32
  }
}

</mosaic_0001>

<llo_original>
// kernel: tpu_custom_call.1
$region0: #{tpu_custom_call.1}
  #allocation0 [shape = 'u32[]', space=smem, size = 0x4, offset = 0x4, fixed_abs, tag = 'smem constant byte address 0x4 - core index']
  #allocation1 [shape = 'u32[144,128]{1,0:T(1,128)}', space=vmem, size = 0x12000, scoped, tag = 'internal scratch']
  %s0 = inlined_call_operand.hbm [shape: u8[147,2048], index: 0, kind: input, shape index: {}]
  %s1 = inlined_call_operand.hbm [shape: f32[147,2048], index: 1, kind: output, shape index: {}]
  %s2 = sld [smem:[#allocation0]]
  $region18: #{tpu_custom_call.1} parent=0
    _
  %s4 = ssub.s32 1, %s2
  %s5 = scalar_select 0, %s4, %s2
  $region1: #{tpu_custom_call.1} parent=0
    #allocation2 [shape = 'u8[311296]{0}', space=vmem, size = 0x4c000, scoped, tag = 'input window, operand 0, single buffered']
    #allocation3 [shape = 's32[1]{0}', space=sflag, size = 0x4, scoped, tag = 'scoped memory for tpu_custom_call.1']
    #allocation4 [shape = 's32[1]{0}', space=sflag, size = 0x4, scoped, tag = 'scoped memory for tpu_custom_call.1']
    #allocation5 [shape = 'u8[1245184]{0}', space=vmem, size = 0x130000, scoped, tag = 'output window, operand 0, single buffered']
    %6 = vsyncpa [#allocation3], 0
    %7 = vsyncpa [#allocation4], 0
    // Predicated region
    $region2: #{tpu_custom_call.1} parent=1 // pred_check
      _
    $region3: #{tpu_custom_call.1} parent=1 // pred_check_branch
      %9 = sbr.rel (0) target = $region5
    $region4: #{tpu_custom_call.1} parent=1 // pred_region
      %s11 = ssub.s32 9728, 9728
      %12 = vsyncadd [#allocation3], %s11
      %s13 = sshll.u32 [#allocation2], 4
      %s14 = int_to_ptr.vmem [resolvable:$true] %s13
      %19 = dma.hbm_to_vmem [thread:$0]  %s0, 9728, %s14, [#allocation3], 512, 512, 32
    $region5: #{tpu_custom_call.1} parent=1 // pred_fallthru
      _
    // Predicated region
    $region6: #{tpu_custom_call.1} parent=1 // pred_check
      _
    $region7: #{tpu_custom_call.1} parent=1 // pred_check_branch
      %21 = sbr.rel (0) target = $region9
    $region8: #{tpu_custom_call.1} parent=1 // pred_region
      %22 = dma.done [#allocation3], 9728
    $region9: #{tpu_custom_call.1} parent=1 // pred_fallthru
      _
    %v23 = vld [vmem:[#allocation2] sm:$0xff]
    %v24 = vld [vmem:[#allocation2 + $0x8] sm:$0xff]
    %v25 = vld [vmem:[#allocation2 + $0x10] sm:$0xff]
    %v26 = vld [vmem:[#allocation2 + $0x18] sm:$0xff]
    %v27 = vld [vmem:[#allocation2 + $0x20] sm:$0xff]
    %v28 = vld [vmem:[#allocation2 + $0x28] sm:$0xff]
    %v29 = vld [vmem:[#allocation2 + $0x30] sm:$0xff]
    %v30 = vld [vmem:[#allocation2 + $0x38] sm:$0xff]
    %v31 = vld [vmem:[#allocation2 + $0x40] sm:$0xff]
    %v32 = vld [vmem:[#allocation2 + $0x48] sm:$0xff]
    %v33 = vld [vmem:[#allocation2 + $0x50] sm:$0xff]
    %v34 = vld [vmem:[#allocation2 + $0x58] sm:$0xff]
    %v35 = vld [vmem:[#allocation2 + $0x60] sm:$0xff]
    %v36 = vld [vmem:[#allocation2 + $0x68] sm:$0xff]
    %v37 = vld [vmem:[#allocation2 + $0x70] sm:$0xff]
    %v38 = vld [vmem:[#allocation2 + $0x78] sm:$0xff]
    %v39 = vld [vmem:[#allocation2 + $0x80] sm:$0xff]
    %v40 = vld [vmem:[#allocation2 + $0x88] sm:$0xff]
    %v41 = vld [vmem:[#allocation2 + $0x90] sm:$0xff]
    %v42 = vld [vmem:[#allocation2 + $0x98] sm:$0xff]
    %v43 = vld [vmem:[#allocation2 + $0xa0] sm:$0xff]
    %v44 = vld [vmem:[#allocation2 + $0xa8] sm:$0xff]
    %v45 = vld [vmem:[#allocation2 + $0xb0] sm:$0xff]
    %v46 = vld [vmem:[#allocation2 + $0xb8] sm:$0xff]
    %v47 = vld [vmem:[#allocation2 + $0xc0] sm:$0xff]
    %v48 = vld [vmem:[#allocation2 + $0xc8] sm:$0xff]
    %v49 = vld [vmem:[#allocation2 + $0xd0] sm:$0xff]
    %v50 = vld [vmem:[#allocation2 + $0xd8] sm:$0xff]
    %v51 = vld [vmem:[#allocation2 + $0xe0] sm:$0xff]
    %v52 = vld [vmem:[#allocation2 + $0xe8] sm:$0xff]
    %v53 = vld [vmem:[#allocation2 + $0xf0] sm:$0xff]
    %v54 = vld [vmem:[#allocation2 + $0xf8] sm:$0xff]
    %v55 = vld [vmem:[#allocation2 + $0x100] sm:$0xff]
    %v56 = vld [vmem:[#allocation2 + $0x108] sm:$0xff]
    %v57 = vld [vmem:[#allocation2 + $0x110] sm:$0xff]
    %v58 = vld [vmem:[#allocation2 + $0x118] sm:$0xff]
    %v59 = vld [vmem:[#allocation2 + $0x120] sm:$0xff]
    %v60 = vld [vmem:[#allocation2 + $0x128] sm:$0xff]
    %v61 = vld [vmem:[#allocation2 + $0x130] sm:$0xff]
    %v62 = vld [vmem:[#allocation2 + $0x138] sm:$0xff]
    %v63 = vld [vmem:[#allocation2 + $0x140] sm:$0xff]
    %v64 = vld [vmem:[#allocation2 + $0x148] sm:$0xff]
    %v65 = vld [vmem:[#allocation2 + $0x150] sm:$0xff]
    %v66 = vld [vmem:[#allocation2 + $0x158] sm:$0xff]
    %v67 = vld [vmem:[#allocation2 + $0x160] sm:$0xff]
    %v68 = vld [vmem:[#allocation2 + $0x168] sm:$0xff]
    %v69 = vld [vmem:[#allocation2 + $0x170] sm:$0xff]
    %v70 = vld [vmem:[#allocation2 + $0x178] sm:$0xff]
    %v71 = vld [vmem:[#allocation2 + $0x180] sm:$0xff]
    %v72 = vld [vmem:[#allocation2 + $0x188] sm:$0xff]
    %v73 = vld [vmem:[#allocation2 + $0x190] sm:$0xff]
    %v74 = vld [vmem:[#allocation2 + $0x198] sm:$0xff]
    %v75 = vld [vmem:[#allocation2 + $0x1a0] sm:$0xff]
    %v76 = vld [vmem:[#allocation2 + $0x1a8] sm:$0xff]
    %v77 = vld [vmem:[#allocation2 + $0x1b0] sm:$0xff]
    %v78 = vld [vmem:[#allocation2 + $0x1b8] sm:$0xff]
    %v79 = vld [vmem:[#allocation2 + $0x1c0] sm:$0xff]
    %v80 = vld [vmem:[#allocation2 + $0x1c8] sm:$0xff]
    %v81 = vld [vmem:[#allocation2 + $0x1d0] sm:$0xff]
    %v82 = vld [vmem:[#allocation2 + $0x1d8] sm:$0xff]
    %v83 = vld [vmem:[#allocation2 + $0x1e0] sm:$0xff]
    %v84 = vld [vmem:[#allocation2 + $0x1e8] sm:$0xff]
    %v85 = vld [vmem:[#allocation2 + $0x1f0] sm:$0xff]
    %v86 = vld [vmem:[#allocation2 + $0x1f8] sm:$0xff]
    %v87 = vld [vmem:[#allocation2 + $0x200] sm:$0xff]
    %v88 = vld [vmem:[#allocation2 + $0x208] sm:$0xff]
    %v89 = vld [vmem:[#allocation2 + $0x210] sm:$0xff]
    %v90 = vld [vmem:[#allocation2 + $0x218] sm:$0xff]
    %v91 = vld [vmem:[#allocation2 + $0x220] sm:$0xff]
    %v92 = vld [vmem:[#allocation2 + $0x228] sm:$0xff]
    %v93 = vld [vmem:[#allocation2 + $0x230] sm:$0xff]
    %v94 = vld [vmem:[#allocation2 + $0x238] sm:$0xff]
    %v95 = vld [vmem:[#allocation2 + $0x240] sm:$0x55]
    %v96 = vld [vmem:[#allocation2 + $0x248] sm:$0x55]
    %v97 = vld [vmem:[#allocation2 + $0x250] sm:$0x55]
    %v98 = vld [vmem:[#allocation2 + $0x258] sm:$0x55]
    %v99 = vunpack.c.0.s8 %v23
    %v100 = vunpack.c.1.s8 %v23
    %v101 = vunpack.c.2.s8 %v23
    %v102 = vunpack.c.3.s8 %v23
    %v103 = vunpack.c.0.s8 %v24
    %v104 = vunpack.c.1.s8 %v24
    %v105 = vunpack.c.2.s8 %v24
    %v106 = vunpack.c.3.s8 %v24
    %v107 = vunpack.c.0.s8 %v25
    %v108 = vunpack.c.1.s8 %v25
    %v109 = vunpack.c.2.s8 %v25
    %v110 = vunpack.c.3.s8 %v25
    %v111 = vunpack.c.0.s8 %v26
    %v112 = vunpack.c.1.s8 %v26
    %v113 = vunpack.c.2.s8 %v26
    %v114 = vunpack.c.3.s8 %v26
    %v115 = vunpack.c.0.s8 %v27
    %v116 = vunpack.c.1.s8 %v27
    %v117 = vunpack.c.2.s8 %v27
    %v118 = vunpack.c.3.s8 %v27
    %v119 = vunpack.c.0.s8 %v28
    %v120 = vunpack.c.1.s8 %v28
    %v121 = vunpack.c.2.s8 %v28
    %v122 = vunpack.c.3.s8 %v28
    %v123 = vunpack.c.0.s8 %v29
    %v124 = vunpack.c.1.s8 %v29
    %v125 = vunpack.c.2.s8 %v29
    %v126 = vunpack.c.3.s8 %v29
    %v127 = vunpack.c.0.s8 %v30
    %v128 = vunpack.c.1.s8 %v30
    %v129 = vunpack.c.2.s8 %v30
    %v130 = vunpack.c.3.s8 %v30
    %v131 = vunpack.c.0.s8 %v31
    %v132 = vunpack.c.1.s8 %v31
    %v133 = vunpack.c.2.s8 %v31
    %v134 = vunpack.c.3.s8 %v31
    %v135 = vunpack.c.0.s8 %v32
    %v136 = vunpack.c.1.s8 %v32
    %v137 = vunpack.c.2.s8 %v32
    %v138 = vunpack.c.3.s8 %v32
    %v139 = vunpack.c.0.s8 %v33
    %v140 = vunpack.c.1.s8 %v33
    %v141 = vunpack.c.2.s8 %v33
    %v142 = vunpack.c.3.s8 %v33
    %v143 = vunpack.c.0.s8 %v34
    %v144 = vunpack.c.1.s8 %v34
    %v145 = vunpack.c.2.s8 %v34
    %v146 = vunpack.c.3.s8 %v34
    %v147 = vunpack.c.0.s8 %v35
    %v148 = vunpack.c.1.s8 %v35
    %v149 = vunpack.c.2.s8 %v35
    %v150 = vunpack.c.3.s8 %v35
    %v151 = vunpack.c.0.s8 %v36
    %v152 = vunpack.c.1.s8 %v36
    %v153 = vunpack.c.2.s8 %v36
    %v154 = vunpack.c.3.s8 %v36
    %v155 = vunpack.c.0.s8 %v37
    %v156 = vunpack.c.1.s8 %v37
    %v157 = vunpack.c.2.s8 %v37
    %v158 = vunpack.c.3.s8 %v37
    %v159 = vunpack.c.0.s8 %v38
    %v160 = vunpack.c.1.s8 %v38
    %v161 = vunpack.c.2.s8 %v38
    %v162 = vunpack.c.3.s8 %v38
    %v163 = vunpack.c.0.s8 %v39
    %v164 = vunpack.c.1.s8 %v39
    %v165 = vunpack.c.2.s8 %v39
    %v166 = vunpack.c.3.s8 %v39
    %v167 = vunpack.c.0.s8 %v40
    %v168 = vunpack.c.1.s8 %v40
    %v169 = vunpack.c.2.s8 %v40
    %v170 = vunpack.c.3.s8 %v40
    %v171 = vunpack.c.0.s8 %v41
    %v172 = vunpack.c.1.s8 %v41
    %v173 = vunpack.c.2.s8 %v41
    %v174 = vunpack.c.3.s8 %v41
    %v175 = vunpack.c.0.s8 %v42
    %v176 = vunpack.c.1.s8 %v42
    %v177 = vunpack.c.2.s8 %v42
    %v178 = vunpack.c.3.s8 %v42
    %v179 = vunpack.c.0.s8 %v43
    %v180 = vunpack.c.1.s8 %v43
    %v181 = vunpack.c.2.s8 %v43
    %v182 = vunpack.c.3.s8 %v43
    %v183 = vunpack.c.0.s8 %v44
    %v184 = vunpack.c.1.s8 %v44
    %v185 = vunpack.c.2.s8 %v44
    %v186 = vunpack.c.3.s8 %v44
    %v187 = vunpack.c.0.s8 %v45
    %v188 = vunpack.c.1.s8 %v45
    %v189 = vunpack.c.2.s8 %v45
    %v190 = vunpack.c.3.s8 %v45
    %v191 = vunpack.c.0.s8 %v46
    %v192 = vunpack.c.1.s8 %v46
    %v193 = vunpack.c.2.s8 %v46
    %v194 = vunpack.c.3.s8 %v46
    %v195 = vunpack.c.0.s8 %v47
    %v196 = vunpack.c.1.s8 %v47
    %v197 = vunpack.c.2.s8 %v47
    %v198 = vunpack.c.3.s8 %v47
    %v199 = vunpack.c.0.s8 %v48
    %v200 = vunpack.c.1.s8 %v48
    %v201 = vunpack.c.2.s8 %v48
    %v202 = vunpack.c.3.s8 %v48
    %v203 = vunpack.c.0.s8 %v49
    %v204 = vunpack.c.1.s8 %v49
    %v205 = vunpack.c.2.s8 %v49
    %v206 = vunpack.c.3.s8 %v49
    %v207 = vunpack.c.0.s8 %v50
    %v208 = vunpack.c.1.s8 %v50
    %v209 = vunpack.c.2.s8 %v50
    %v210 = vunpack.c.3.s8 %v50
    %v211 = vunpack.c.0.s8 %v51
    %v212 = vunpack.c.1.s8 %v51
    %v213 = vunpack.c.2.s8 %v51
    %v214 = vunpack.c.3.s8 %v51
    %v215 = vunpack.c.0.s8 %v52
    %v216 = vunpack.c.1.s8 %v52
    %v217 = vunpack.c.2.s8 %v52
    %v218 = vunpack.c.3.s8 %v52
    %v219 = vunpack.c.0.s8 %v53
    %v220 = vunpack.c.1.s8 %v53
    %v221 = vunpack.c.2.s8 %v53
    %v222 = vunpack.c.3.s8 %v53
    %v223 = vunpack.c.0.s8 %v54
    %v224 = vunpack.c.1.s8 %v54
    %v225 = vunpack.c.2.s8 %v54
    %v226 = vunpack.c.3.s8 %v54
    %v227 = vunpack.c.0.s8 %v55
    %v228 = vunpack.c.1.s8 %v55
    %v229 = vunpack.c.2.s8 %v55
    %v230 = vunpack.c.3.s8 %v55
    %v231 = vunpack.c.0.s8 %v56
    %v232 = vunpack.c.1.s8 %v56
    %v233 = vunpack.c.2.s8 %v56
    %v234 = vunpack.c.3.s8 %v56
    %v235 = vunpack.c.0.s8 %v57
    %v236 = vunpack.c.1.s8 %v57
    %v237 = vunpack.c.2.s8 %v57
    %v238 = vunpack.c.3.s8 %v57
    %v239 = vunpack.c.0.s8 %v58
    %v240 = vunpack.c.1.s8 %v58
    %v241 = vunpack.c.2.s8 %v58
    %v242 = vunpack.c.3.s8 %v58
    %v243 = vunpack.c.0.s8 %v59
    %v244 = vunpack.c.1.s8 %v59
    %v245 = vunpack.c.2.s8 %v59
    %v246 = vunpack.c.3.s8 %v59
    %v247 = vunpack.c.0.s8 %v60
    %v248 = vunpack.c.1.s8 %v60
    %v249 = vunpack.c.2.s8 %v60
    %v250 = vunpack.c.3.s8 %v60
    %v251 = vunpack.c.0.s8 %v61
    %v252 = vunpack.c.1.s8 %v61
    %v253 = vunpack.c.2.s8 %v61
    %v254 = vunpack.c.3.s8 %v61
    %v255 = vunpack.c.0.s8 %v62
    %v256 = vunpack.c.1.s8 %v62
    %v257 = vunpack.c.2.s8 %v62
    %v258 = vunpack.c.3.s8 %v62
    %v259 = vunpack.c.0.s8 %v63
    %v260 = vunpack.c.1.s8 %v63
    %v261 = vunpack.c.2.s8 %v63
    %v262 = vunpack.c.3.s8 %v63
    %v263 = vunpack.c.0.s8 %v64
    %v264 = vunpack.c.1.s8 %v64
    %v265 = vunpack.c.2.s8 %v64
    %v266 = vunpack.c.3.s8 %v64
    %v267 = vunpack.c.0.s8 %v65
    %v268 = vunpack.c.1.s8 %v65
    %v269 = vunpack.c.2.s8 %v65
    %v270 = vunpack.c.3.s8 %v65
    %v271 = vunpack.c.0.s8 %v66
    %v272 = vunpack.c.1.s8 %v66
    %v273 = vunpack.c.2.s8 %v66
    %v274 = vunpack.c.3.s8 %v66
    %v275 = vunpack.c.0.s8 %v67
    %v276 = vunpack.c.1.s8 %v67
    %v277 = vunpack.c.2.s8 %v67
    %v278 = vunpack.c.3.s8 %v67
    %v279 = vunpack.c.0.s8 %v68
    %v280 = vunpack.c.1.s8 %v68
    %v281 = vunpack.c.2.s8 %v68
    %v282 = vunpack.c.3.s8 %v68
    %v283 = vunpack.c.0.s8 %v69
    %v284 = vunpack.c.1.s8 %v69
    %v285 = vunpack.c.2.s8 %v69
    %v286 = vunpack.c.3.s8 %v69
    %v287 = vunpack.c.0.s8 %v70
    %v288 = vunpack.c.1.s8 %v70
    %v289 = vunpack.c.2.s8 %v70
    %v290 = vunpack.c.3.s8 %v70
    %v291 = vunpack.c.0.s8 %v71
    %v292 = vunpack.c.1.s8 %v71
    %v293 = vunpack.c.2.s8 %v71
    %v294 = vunpack.c.3.s8 %v71
    %v295 = vunpack.c.0.s8 %v72
    %v296 = vunpack.c.1.s8 %v72
    %v297 = vunpack.c.2.s8 %v72
    %v298 = vunpack.c.3.s8 %v72
    %v299 = vunpack.c.0.s8 %v73
    %v300 = vunpack.c.1.s8 %v73
    %v301 = vunpack.c.2.s8 %v73
    %v302 = vunpack.c.3.s8 %v73
    %v303 = vunpack.c.0.s8 %v74
    %v304 = vunpack.c.1.s8 %v74
    %v305 = vunpack.c.2.s8 %v74
    %v306 = vunpack.c.3.s8 %v74
    %v307 = vunpack.c.0.s8 %v75
    %v308 = vunpack.c.1.s8 %v75
    %v309 = vunpack.c.2.s8 %v75
    %v310 = vunpack.c.3.s8 %v75
    %v311 = vunpack.c.0.s8 %v76
    %v312 = vunpack.c.1.s8 %v76
    %v313 = vunpack.c.2.s8 %v76
    %v314 = vunpack.c.3.s8 %v76
    %v315 = vunpack.c.0.s8 %v77
    %v316 = vunpack.c.1.s8 %v77
    %v317 = vunpack.c.2.s8 %v77
    %v318 = vunpack.c.3.s8 %v77
    %v319 = vunpack.c.0.s8 %v78
    %v320 = vunpack.c.1.s8 %v78
    %v321 = vunpack.c.2.s8 %v78
    %v322 = vunpack.c.3.s8 %v78
    %v323 = vunpack.c.0.s8 %v79
    %v324 = vunpack.c.1.s8 %v79
    %v325 = vunpack.c.2.s8 %v79
    %v326 = vunpack.c.3.s8 %v79
    %v327 = vunpack.c.0.s8 %v80
    %v328 = vunpack.c.1.s8 %v80
    %v329 = vunpack.c.2.s8 %v80
    %v330 = vunpack.c.3.s8 %v80
    %v331 = vunpack.c.0.s8 %v81
    %v332 = vunpack.c.1.s8 %v81
    %v333 = vunpack.c.2.s8 %v81
    %v334 = vunpack.c.3.s8 %v81
    %v335 = vunpack.c.0.s8 %v82
    %v336 = vunpack.c.1.s8 %v82
    %v337 = vunpack.c.2.s8 %v82
    %v338 = vunpack.c.3.s8 %v82
    %v339 = vunpack.c.0.s8 %v83
    %v340 = vunpack.c.1.s8 %v83
    %v341 = vunpack.c.2.s8 %v83
    %v342 = vunpack.c.3.s8 %v83
    %v343 = vunpack.c.0.s8 %v84
    %v344 = vunpack.c.1.s8 %v84
    %v345 = vunpack.c.2.s8 %v84
    %v346 = vunpack.c.3.s8 %v84
    %v347 = vunpack.c.0.s8 %v85
    %v348 = vunpack.c.1.s8 %v85
    %v349 = vunpack.c.2.s8 %v85
    %v350 = vunpack.c.3.s8 %v85
    %v351 = vunpack.c.0.s8 %v86
    %v352 = vunpack.c.1.s8 %v86
    %v353 = vunpack.c.2.s8 %v86
    %v354 = vunpack.c.3.s8 %v86
    %v355 = vunpack.c.0.s8 %v87
    %v356 = vunpack.c.1.s8 %v87
    %v357 = vunpack.c.2.s8 %v87
    %v358 = vunpack.c.3.s8 %v87
    %v359 = vunpack.c.0.s8 %v88
    %v360 = vunpack.c.1.s8 %v88
    %v361 = vunpack.c.2.s8 %v88
    %v362 = vunpack.c.3.s8 %v88
    %v363 = vunpack.c.0.s8 %v89
    %v364 = vunpack.c.1.s8 %v89
    %v365 = vunpack.c.2.s8 %v89
    %v366 = vunpack.c.3.s8 %v89
    %v367 = vunpack.c.0.s8 %v90
    %v368 = vunpack.c.1.s8 %v90
    %v369 = vunpack.c.2.s8 %v90
    %v370 = vunpack.c.3.s8 %v90
    %v371 = vunpack.c.0.s8 %v91
    %v372 = vunpack.c.1.s8 %v91
    %v373 = vunpack.c.2.s8 %v91
    %v374 = vunpack.c.3.s8 %v91
    %v375 = vunpack.c.0.s8 %v92
    %v376 = vunpack.c.1.s8 %v92
    %v377 = vunpack.c.2.s8 %v92
    %v378 = vunpack.c.3.s8 %v92
    %v379 = vunpack.c.0.s8 %v93
    %v380 = vunpack.c.1.s8 %v93
    %v381 = vunpack.c.2.s8 %v93
    %v382 = vunpack.c.3.s8 %v93
    %v383 = vunpack.c.0.s8 %v94
    %v384 = vunpack.c.1.s8 %v94
    %v385 = vunpack.c.2.s8 %v94
    %v386 = vunpack.c.3.s8 %v94
    %v387 = vunpack.c.0.s8 %v95
    %v388 = vunpack.c.1.s8 %v95
    %v389 = vunpack.c.2.s8 %v95
    %v390 = vunpack.c.3.s8 %v95
    %v391 = vunpack.c.0.s8 %v96
    %v392 = vunpack.c.1.s8 %v96
    %v393 = vunpack.c.2.s8 %v96
    %v394 = vunpack.c.3.s8 %v96
    %v395 = vunpack.c.0.s8 %v97
    %v396 = vunpack.c.1.s8 %v97
    %v397 = vunpack.c.2.s8 %v97
    %v398 = vunpack.c.3.s8 %v97
    %v399 = vunpack.c.0.s8 %v98
    %v400 = vunpack.c.1.s8 %v98
    %v401 = vunpack.c.2.s8 %v98
    %v402 = vunpack.c.3.s8 %v98
    %v403 = vand.u32 %v99, 255
    %v404 = vand.u32 %v100, 255
    %v405 = vand.u32 %v101, 255
    %v406 = vand.u32 %v102, 255
    %v407 = vand.u32 %v103, 255
    %v408 = vand.u32 %v104, 255
    %v409 = vand.u32 %v105, 255
    %v410 = vand.u32 %v106, 255
    %v411 = vand.u32 %v107, 255
    %v412 = vand.u32 %v108, 255
    %v413 = vand.u32 %v109, 255
    %v414 = vand.u32 %v110, 255
    %v415 = vand.u32 %v111, 255
    %v416 = vand.u32 %v112, 255
    %v417 = vand.u32 %v113, 255
    %v418 = vand.u32 %v114, 255
    %v419 = vand.u32 %v115, 255
    %v420 = vand.u32 %v116, 255
    %v421 = vand.u32 %v117, 255
    %v422 = vand.u32 %v118, 255
    %v423 = vand.u32 %v119, 255
    %v424 = vand.u32 %v120, 255
    %v425 = vand.u32 %v121, 255
    %v426 = vand.u32 %v122, 255
    %v427 = vand.u32 %v123, 255
    %v428 = vand.u32 %v124, 255
    %v429 = vand.u32 %v125, 255
    %v430 = vand.u32 %v126, 255
    %v431 = vand.u32 %v127, 255
    %v432 = vand.u32 %v128, 255
    %v433 = vand.u32 %v129, 255
    %v434 = vand.u32 %v130, 255
    %v435 = vand.u32 %v131, 255
    %v436 = vand.u32 %v132, 255
    %v437 = vand.u32 %v133, 255
    %v438 = vand.u32 %v134, 255
    %v439 = vand.u32 %v135, 255
    %v440 = vand.u32 %v136, 255
    %v441 = vand.u32 %v137, 255
    %v442 = vand.u32 %v138, 255
    %v443 = vand.u32 %v139, 255
    %v444 = vand.u32 %v140, 255
    %v445 = vand.u32 %v141, 255
    %v446 = vand.u32 %v142, 255
    %v447 = vand.u32 %v143, 255
    %v448 = vand.u32 %v144, 255
    %v449 = vand.u32 %v145, 255
    %v450 = vand.u32 %v146, 255
    %v451 = vand.u32 %v147, 255
    %v452 = vand.u32 %v148, 255
    %v453 = vand.u32 %v149, 255
    %v454 = vand.u32 %v150, 255
    %v455 = vand.u32 %v151, 255
    %v456 = vand.u32 %v152, 255
    %v457 = vand.u32 %v153, 255
    %v458 = vand.u32 %v154, 255
    %v459 = vand.u32 %v155, 255
    %v460 = vand.u32 %v156, 255
    %v461 = vand.u32 %v157, 255
    %v462 = vand.u32 %v158, 255
    %v463 = vand.u32 %v159, 255
    %v464 = vand.u32 %v160, 255
    %v465 = vand.u32 %v161, 255
    %v466 = vand.u32 %v162, 255
    %v467 = vand.u32 %v163, 255
    %v468 = vand.u32 %v164, 255
    %v469 = vand.u32 %v165, 255
    %v470 = vand.u32 %v166, 255
    %v471 = vand.u32 %v167, 255
    %v472 = vand.u32 %v168, 255
    %v473 = vand.u32 %v169, 255
    %v474 = vand.u32 %v170, 255
    %v475 = vand.u32 %v171, 255
    %v476 = vand.u32 %v172, 255
    %v477 = vand.u32 %v173, 255
    %v478 = vand.u32 %v174, 255
    %v479 = vand.u32 %v175, 255
    %v480 = vand.u32 %v176, 255
    %v481 = vand.u32 %v177, 255
    %v482 = vand.u32 %v178, 255
    %v483 = vand.u32 %v179, 255
    %v484 = vand.u32 %v180, 255
    %v485 = vand.u32 %v181, 255
    %v486 = vand.u32 %v182, 255
    %v487 = vand.u32 %v183, 255
    %v488 = vand.u32 %v184, 255
    %v489 = vand.u32 %v185, 255
    %v490 = vand.u32 %v186, 255
    %v491 = vand.u32 %v187, 255
    %v492 = vand.u32 %v188, 255
    %v493 = vand.u32 %v189, 255
    %v494 = vand.u32 %v190, 255
    %v495 = vand.u32 %v191, 255
    %v496 = vand.u32 %v192, 255
    %v497 = vand.u32 %v193, 255
    %v498 = vand.u32 %v194, 255
    %v499 = vand.u32 %v195, 255
    %v500 = vand.u32 %v196, 255
    %v501 = vand.u32 %v197, 255
    %v502 = vand.u32 %v198, 255
    %v503 = vand.u32 %v199, 255
    %v504 = vand.u32 %v200, 255
    %v505 = vand.u32 %v201, 255
    %v506 = vand.u32 %v202, 255
    %v507 = vand.u32 %v203, 255
    %v508 = vand.u32 %v204, 255
    %v509 = vand.u32 %v205, 255
    %v510 = vand.u32 %v206, 255
    %v511 = vand.u32 %v207, 255
    %v512 = vand.u32 %v208, 255
    %v513 = vand.u32 %v209, 255
    %v514 = vand.u32 %v210, 255
    %v515 = vand.u32 %v211, 255
    %v516 = vand.u32 %v212, 255
    %v517 = vand.u32 %v213, 255
    %v518 = vand.u32 %v214, 255
    %v519 = vand.u32 %v215, 255
    %v520 = vand.u32 %v216, 255
    %v521 = vand.u32 %v217, 255
    %v522 = vand.u32 %v218, 255
    %v523 = vand.u32 %v219, 255
    %v524 = vand.u32 %v220, 255
    %v525 = vand.u32 %v221, 255
    %v526 = vand.u32 %v222, 255
    %v527 = vand.u32 %v223, 255
    %v528 = vand.u32 %v224, 255
    %v529 = vand.u32 %v225, 255
    %v530 = vand.u32 %v226, 255
    %v531 = vand.u32 %v227, 255
    %v532 = vand.u32 %v228, 255
    %v533 = vand.u32 %v229, 255
    %v534 = vand.u32 %v230, 255
    %v535 = vand.u32 %v231, 255
    %v536 = vand.u32 %v232, 255
    %v537 = vand.u32 %v233, 255
    %v538 = vand.u32 %v234, 255
    %v539 = vand.u32 %v235, 255
    %v540 = vand.u32 %v236, 255
    %v541 = vand.u32 %v237, 255
    %v542 = vand.u32 %v238, 255
    %v543 = vand.u32 %v239, 255
    %v544 = vand.u32 %v240, 255
    %v545 = vand.u32 %v241, 255
    %v546 = vand.u32 %v242, 255
    %v547 = vand.u32 %v243, 255
    %v548 = vand.u32 %v244, 255
    %v549 = vand.u32 %v245, 255
    %v550 = vand.u32 %v246, 255
    %v551 = vand.u32 %v247, 255
    %v552 = vand.u32 %v248, 255
    %v553 = vand.u32 %v249, 255
    %v554 = vand.u32 %v250, 255
    %v555 = vand.u32 %v251, 255
    %v556 = vand.u32 %v252, 255
    %v557 = vand.u32 %v253, 255
    %v558 = vand.u32 %v254, 255
    %v559 = vand.u32 %v255, 255
    %v560 = vand.u32 %v256, 255
    %v561 = vand.u32 %v257, 255
    %v562 = vand.u32 %v258, 255
    %v563 = vand.u32 %v259, 255
    %v564 = vand.u32 %v260, 255
    %v565 = vand.u32 %v261, 255
    %v566 = vand.u32 %v262, 255
    %v567 = vand.u32 %v263, 255
    %v568 = vand.u32 %v264, 255
    %v569 = vand.u32 %v265, 255
    %v570 = vand.u32 %v266, 255
    %v571 = vand.u32 %v267, 255
    %v572 = vand.u32 %v268, 255
    %v573 = vand.u32 %v269, 255
    %v574 = vand.u32 %v270, 255
    %v575 = vand.u32 %v271, 255
    %v576 = vand.u32 %v272, 255
    %v577 = vand.u32 %v273, 255
    %v578 = vand.u32 %v274, 255
    %v579 = vand.u32 %v275, 255
    %v580 = vand.u32 %v276, 255
    %v581 = vand.u32 %v277, 255
    %v582 = vand.u32 %v278, 255
    %v583 = vand.u32 %v279, 255
    %v584 = vand.u32 %v280, 255
    %v585 = vand.u32 %v281, 255
    %v586 = vand.u32 %v282, 255
    %v587 = vand.u32 %v283, 255
    %v588 = vand.u32 %v284, 255
    %v589 = vand.u32 %v285, 255
    %v590 = vand.u32 %v286, 255
    %v591 = vand.u32 %v287, 255
    %v592 = vand.u32 %v288, 255
    %v593 = vand.u32 %v289, 255
    %v594 = vand.u32 %v290, 255
    %v595 = vand.u32 %v291, 255
    %v596 = vand.u32 %v292, 255
    %v597 = vand.u32 %v293, 255
    %v598 = vand.u32 %v294, 255
    %v599 = vand.u32 %v295, 255
    %v600 = vand.u32 %v296, 255
    %v601 = vand.u32 %v297, 255
    %v602 = vand.u32 %v298, 255
    %v603 = vand.u32 %v299, 255
    %v604 = vand.u32 %v300, 255
    %v605 = vand.u32 %v301, 255
    %v606 = vand.u32 %v302, 255
    %v607 = vand.u32 %v303, 255
    %v608 = vand.u32 %v304, 255
    %v609 = vand.u32 %v305, 255
    %v610 = vand.u32 %v306, 255
    %v611 = vand.u32 %v307, 255
    %v612 = vand.u32 %v308, 255
    %v613 = vand.u32 %v309, 255
    %v614 = vand.u32 %v310, 255
    %v615 = vand.u32 %v311, 255
    %v616 = vand.u32 %v312, 255
    %v617 = vand.u32 %v313, 255
    %v618 = vand.u32 %v314, 255
    %v619 = vand.u32 %v315, 255
    %v620 = vand.u32 %v316, 255
    %v621 = vand.u32 %v317, 255
    %v622 = vand.u32 %v318, 255
    %v623 = vand.u32 %v319, 255
    %v624 = vand.u32 %v320, 255
    %v625 = vand.u32 %v321, 255
    %v626 = vand.u32 %v322, 255
    %v627 = vand.u32 %v323, 255
    %v628 = vand.u32 %v324, 255
    %v629 = vand.u32 %v325, 255
    %v630 = vand.u32 %v326, 255
    %v631 = vand.u32 %v327, 255
    %v632 = vand.u32 %v328, 255
    %v633 = vand.u32 %v329, 255
    %v634 = vand.u32 %v330, 255
    %v635 = vand.u32 %v331, 255
    %v636 = vand.u32 %v332, 255
    %v637 = vand.u32 %v333, 255
    %v638 = vand.u32 %v334, 255
    %v639 = vand.u32 %v335, 255
    %v640 = vand.u32 %v336, 255
    %v641 = vand.u32 %v337, 255
    %v642 = vand.u32 %v338, 255
    %v643 = vand.u32 %v339, 255
    %v644 = vand.u32 %v340, 255
    %v645 = vand.u32 %v341, 255
    %v646 = vand.u32 %v342, 255
    %v647 = vand.u32 %v343, 255
    %v648 = vand.u32 %v344, 255
    %v649 = vand.u32 %v345, 255
    %v650 = vand.u32 %v346, 255
    %v651 = vand.u32 %v347, 255
    %v652 = vand.u32 %v348, 255
    %v653 = vand.u32 %v349, 255
    %v654 = vand.u32 %v350, 255
    %v655 = vand.u32 %v351, 255
    %v656 = vand.u32 %v352, 255
    %v657 = vand.u32 %v353, 255
    %v658 = vand.u32 %v354, 255
    %v659 = vand.u32 %v355, 255
    %v660 = vand.u32 %v356, 255
    %v661 = vand.u32 %v357, 255
    %v662 = vand.u32 %v358, 255
    %v663 = vand.u32 %v359, 255
    %v664 = vand.u32 %v360, 255
    %v665 = vand.u32 %v361, 255
    %v666 = vand.u32 %v362, 255
    %v667 = vand.u32 %v363, 255
    %v668 = vand.u32 %v364, 255
    %v669 = vand.u32 %v365, 255
    %v670 = vand.u32 %v366, 255
    %v671 = vand.u32 %v367, 255
    %v672 = vand.u32 %v368, 255
    %v673 = vand.u32 %v369, 255
    %v674 = vand.u32 %v370, 255
    %v675 = vand.u32 %v371, 255
    %v676 = vand.u32 %v372, 255
    %v677 = vand.u32 %v373, 255
    %v678 = vand.u32 %v374, 255
    %v679 = vand.u32 %v375, 255
    %v680 = vand.u32 %v376, 255
    %v681 = vand.u32 %v377, 255
    %v682 = vand.u32 %v378, 255
    %v683 = vand.u32 %v379, 255
    %v684 = vand.u32 %v380, 255
    %v685 = vand.u32 %v381, 255
    %v686 = vand.u32 %v382, 255
    %v687 = vand.u32 %v383, 255
    %v688 = vand.u32 %v384, 255
    %v689 = vand.u32 %v385, 255
    %v690 = vand.u32 %v386, 255
    %v691 = vand.u32 %v387, 255
    %v692 = vand.u32 %v388, 255
    %v693 = vand.u32 %v389, 255
    %v694 = vand.u32 %v390, 255
    %v695 = vand.u32 %v391, 255
    %v696 = vand.u32 %v392, 255
    %v697 = vand.u32 %v393, 255
    %v698 = vand.u32 %v394, 255
    %v699 = vand.u32 %v395, 255
    %v700 = vand.u32 %v396, 255
    %v701 = vand.u32 %v397, 255
    %v702 = vand.u32 %v398, 255
    %v703 = vand.u32 %v399, 255
    %v704 = vand.u32 %v400, 255
    %v705 = vand.u32 %v401, 255
    %v706 = vand.u32 %v402, 255
    %v707 = vcvt.s32.f32 %v403
    %v708 = vcvt.s32.f32 %v404
    %v709 = vcvt.s32.f32 %v405
    %v710 = vcvt.s32.f32 %v406
    %v711 = vcvt.s32.f32 %v407
    %v712 = vcvt.s32.f32 %v408
    %v713 = vcvt.s32.f32 %v409
    %v714 = vcvt.s32.f32 %v410
    %v715 = vcvt.s32.f32 %v411
    %v716 = vcvt.s32.f32 %v412
    %v717 = vcvt.s32.f32 %v413
    %v718 = vcvt.s32.f32 %v414
    %v719 = vcvt.s32.f32 %v415
    %v720 = vcvt.s32.f32 %v416
    %v721 = vcvt.s32.f32 %v417
    %v722 = vcvt.s32.f32 %v418
    %v723 = vcvt.s32.f32 %v419
    %v724 = vcvt.s32.f32 %v420
    %v725 = vcvt.s32.f32 %v421
    %v726 = vcvt.s32.f32 %v422
    %v727 = vcvt.s32.f32 %v423
    %v728 = vcvt.s32.f32 %v424
    %v729 = vcvt.s32.f32 %v425
    %v730 = vcvt.s32.f32 %v426
    %v731 = vcvt.s32.f32 %v427
    %v732 = vcvt.s32.f32 %v428
    %v733 = vcvt.s32.f32 %v429
    %v734 = vcvt.s32.f32 %v430
    %v735 = vcvt.s32.f32 %v431
    %v736 = vcvt.s32.f32 %v432
    %v737 = vcvt.s32.f32 %v433
    %v738 = vcvt.s32.f32 %v434
    %v739 = vcvt.s32.f32 %v435
    %v740 = vcvt.s32.f32 %v436
    %v741 = vcvt.s32.f32 %v437
    %v742 = vcvt.s32.f32 %v438
    %v743 = vcvt.s32.f32 %v439
    %v744 = vcvt.s32.f32 %v440
    %v745 = vcvt.s32.f32 %v441
    %v746 = vcvt.s32.f32 %v442
    %v747 = vcvt.s32.f32 %v443
    %v748 = vcvt.s32.f32 %v444
    %v749 = vcvt.s32.f32 %v445
    %v750 = vcvt.s32.f32 %v446
    %v751 = vcvt.s32.f32 %v447
    %v752 = vcvt.s32.f32 %v448
    %v753 = vcvt.s32.f32 %v449
    %v754 = vcvt.s32.f32 %v450
    %v755 = vcvt.s32.f32 %v451
    %v756 = vcvt.s32.f32 %v452
    %v757 = vcvt.s32.f32 %v453
    %v758 = vcvt.s32.f32 %v454
    %v759 = vcvt.s32.f32 %v455
    %v760 = vcvt.s32.f32 %v456
    %v761 = vcvt.s32.f32 %v457
    %v762 = vcvt.s32.f32 %v458
    %v763 = vcvt.s32.f32 %v459
    %v764 = vcvt.s32.f32 %v460
    %v765 = vcvt.s32.f32 %v461
    %v766 = vcvt.s32.f32 %v462
    %v767 = vcvt.s32.f32 %v463
    %v768 = vcvt.s32.f32 %v464
    %v769 = vcvt.s32.f32 %v465
    %v770 = vcvt.s32.f32 %v466
    %v771 = vcvt.s32.f32 %v467
    %v772 = vcvt.s32.f32 %v468
    %v773 = vcvt.s32.f32 %v469
    %v774 = vcvt.s32.f32 %v470
    %v775 = vcvt.s32.f32 %v471
    %v776 = vcvt.s32.f32 %v472
    %v777 = vcvt.s32.f32 %v473
    %v778 = vcvt.s32.f32 %v474
    %v779 = vcvt.s32.f32 %v475
    %v780 = vcvt.s32.f32 %v476
    %v781 = vcvt.s32.f32 %v477
    %v782 = vcvt.s32.f32 %v478
    %v783 = vcvt.s32.f32 %v479
    %v784 = vcvt.s32.f32 %v480
    %v785 = vcvt.s32.f32 %v481
    %v786 = vcvt.s32.f32 %v482
    %v787 = vcvt.s32.f32 %v483
    %v788 = vcvt.s32.f32 %v484
    %v789 = vcvt.s32.f32 %v485
    %v790 = vcvt.s32.f32 %v486
    %v791 = vcvt.s32.f32 %v487
    %v792 = vcvt.s32.f32 %v488
    %v793 = vcvt.s32.f32 %v489
    %v794 = vcvt.s32.f32 %v490
    %v795 = vcvt.s32.f32 %v491
    %v796 = vcvt.s32.f32 %v492
    %v797 = vcvt.s32.f32 %v493
    %v798 = vcvt.s32.f32 %v494
    %v799 = vcvt.s32.f32 %v495
    %v800 = vcvt.s32.f32 %v496
    %v801 = vcvt.s32.f32 %v497
    %v802 = vcvt.s32.f32 %v498
    %v803 = vcvt.s32.f32 %v499
    %v804 = vcvt.s32.f32 %v500
    %v805 = vcvt.s32.f32 %v501
    %v806 = vcvt.s32.f32 %v502
    %v807 = vcvt.s32.f32 %v503
    %v808 = vcvt.s32.f32 %v504
    %v809 = vcvt.s32.f32 %v505
    %v810 = vcvt.s32.f32 %v506
    %v811 = vcvt.s32.f32 %v507
    %v812 = vcvt.s32.f32 %v508
    %v813 = vcvt.s32.f32 %v509
    %v814 = vcvt.s32.f32 %v510
    %v815 = vcvt.s32.f32 %v511
    %v816 = vcvt.s32.f32 %v512
    %v817 = vcvt.s32.f32 %v513
    %v818 = vcvt.s32.f32 %v514
    %v819 = vcvt.s32.f32 %v515
    %v820 = vcvt.s32.f32 %v516
    %v821 = vcvt.s32.f32 %v517
    %v822 = vcvt.s32.f32 %v518
    %v823 = vcvt.s32.f32 %v519
    %v824 = vcvt.s32.f32 %v520
    %v825 = vcvt.s32.f32 %v521
    %v826 = vcvt.s32.f32 %v522
    %v827 = vcvt.s32.f32 %v523
    %v828 = vcvt.s32.f32 %v524
    %v829 = vcvt.s32.f32 %v525
    %v830 = vcvt.s32.f32 %v526
    %v831 = vcvt.s32.f32 %v527
    %v832 = vcvt.s32.f32 %v528
    %v833 = vcvt.s32.f32 %v529
    %v834 = vcvt.s32.f32 %v530
    %v835 = vcvt.s32.f32 %v531
    %v836 = vcvt.s32.f32 %v532
    %v837 = vcvt.s32.f32 %v533
    %v838 = vcvt.s32.f32 %v534
    %v839 = vcvt.s32.f32 %v535
    %v840 = vcvt.s32.f32 %v536
    %v841 = vcvt.s32.f32 %v537
    %v842 = vcvt.s32.f32 %v538
    %v843 = vcvt.s32.f32 %v539
    %v844 = vcvt.s32.f32 %v540
    %v845 = vcvt.s32.f32 %v541
    %v846 = vcvt.s32.f32 %v542
    %v847 = vcvt.s32.f32 %v543
    %v848 = vcvt.s32.f32 %v544
    %v849 = vcvt.s32.f32 %v545
    %v850 = vcvt.s32.f32 %v546
    %v851 = vcvt.s32.f32 %v547
    %v852 = vcvt.s32.f32 %v548
    %v853 = vcvt.s32.f32 %v549
    %v854 = vcvt.s32.f32 %v550
    %v855 = vcvt.s32.f32 %v551
    %v856 = vcvt.s32.f32 %v552
    %v857 = vcvt.s32.f32 %v553
    %v858 = vcvt.s32.f32 %v554
    %v859 = vcvt.s32.f32 %v555
    %v860 = vcvt.s32.f32 %v556
    %v861 = vcvt.s32.f32 %v557
    %v862 = vcvt.s32.f32 %v558
    %v863 = vcvt.s32.f32 %v559
    %v864 = vcvt.s32.f32 %v560
    %v865 = vcvt.s32.f32 %v561
    %v866 = vcvt.s32.f32 %v562
    %v867 = vcvt.s32.f32 %v563
    %v868 = vcvt.s32.f32 %v564
    %v869 = vcvt.s32.f32 %v565
    %v870 = vcvt.s32.f32 %v566
    %v871 = vcvt.s32.f32 %v567
    %v872 = vcvt.s32.f32 %v568
    %v873 = vcvt.s32.f32 %v569
    %v874 = vcvt.s32.f32 %v570
    %v875 = vcvt.s32.f32 %v571
    %v876 = vcvt.s32.f32 %v572
    %v877 = vcvt.s32.f32 %v573
    %v878 = vcvt.s32.f32 %v574
    %v879 = vcvt.s32.f32 %v575
    %v880 = vcvt.s32.f32 %v576
    %v881 = vcvt.s32.f32 %v577
    %v882 = vcvt.s32.f32 %v578
    %v883 = vcvt.s32.f32 %v579
    %v884 = vcvt.s32.f32 %v580
    %v885 = vcvt.s32.f32 %v581
    %v886 = vcvt.s32.f32 %v582
    %v887 = vcvt.s32.f32 %v583
    %v888 = vcvt.s32.f32 %v584
    %v889 = vcvt.s32.f32 %v585
    %v890 = vcvt.s32.f32 %v586
    %v891 = vcvt.s32.f32 %v587
    %v892 = vcvt.s32.f32 %v588
    %v893 = vcvt.s32.f32 %v589
    %v894 = vcvt.s32.f32 %v590
    %v895 = vcvt.s32.f32 %v591
    %v896 = vcvt.s32.f32 %v592
    %v897 = vcvt.s32.f32 %v593
    %v898 = vcvt.s32.f32 %v594
    %v899 = vcvt.s32.f32 %v595
    %v900 = vcvt.s32.f32 %v596
    %v901 = vcvt.s32.f32 %v597
    %v902 = vcvt.s32.f32 %v598
    %v903 = vcvt.s32.f32 %v599
    %v904 = vcvt.s32.f32 %v600
    %v905 = vcvt.s32.f32 %v601
    %v906 = vcvt.s32.f32 %v602
    %v907 = vcvt.s32.f32 %v603
    %v908 = vcvt.s32.f32 %v604
    %v909 = vcvt.s32.f32 %v605
    %v910 = vcvt.s32.f32 %v606
    %v911 = vcvt.s32.f32 %v607
    %v912 = vcvt.s32.f32 %v608
    %v913 = vcvt.s32.f32 %v609
    %v914 = vcvt.s32.f32 %v610
    %v915 = vcvt.s32.f32 %v611
    %v916 = vcvt.s32.f32 %v612
    %v917 = vcvt.s32.f32 %v613
    %v918 = vcvt.s32.f32 %v614
    %v919 = vcvt.s32.f32 %v615
    %v920 = vcvt.s32.f32 %v616
    %v921 = vcvt.s32.f32 %v617
    %v922 = vcvt.s32.f32 %v618
    %v923 = vcvt.s32.f32 %v619
    %v924 = vcvt.s32.f32 %v620
    %v925 = vcvt.s32.f32 %v621
    %v926 = vcvt.s32.f32 %v622
    %v927 = vcvt.s32.f32 %v623
    %v928 = vcvt.s32.f32 %v624
    %v929 = vcvt.s32.f32 %v625
    %v930 = vcvt.s32.f32 %v626
    %v931 = vcvt.s32.f32 %v627
    %v932 = vcvt.s32.f32 %v628
    %v933 = vcvt.s32.f32 %v629
    %v934 = vcvt.s32.f32 %v630
    %v935 = vcvt.s32.f32 %v631
    %v936 = vcvt.s32.f32 %v632
    %v937 = vcvt.s32.f32 %v633
    %v938 = vcvt.s32.f32 %v634
    %v939 = vcvt.s32.f32 %v635
    %v940 = vcvt.s32.f32 %v636
    %v941 = vcvt.s32.f32 %v637
    %v942 = vcvt.s32.f32 %v638
    %v943 = vcvt.s32.f32 %v639
    %v944 = vcvt.s32.f32 %v640
    %v945 = vcvt.s32.f32 %v641
    %v946 = vcvt.s32.f32 %v642
    %v947 = vcvt.s32.f32 %v643
    %v948 = vcvt.s32.f32 %v644
    %v949 = vcvt.s32.f32 %v645
    %v950 = vcvt.s32.f32 %v646
    %v951 = vcvt.s32.f32 %v647
    %v952 = vcvt.s32.f32 %v648
    %v953 = vcvt.s32.f32 %v649
    %v954 = vcvt.s32.f32 %v650
    %v955 = vcvt.s32.f32 %v651
    %v956 = vcvt.s32.f32 %v652
    %v957 = vcvt.s32.f32 %v653
    %v958 = vcvt.s32.f32 %v654
    %v959 = vcvt.s32.f32 %v655
    %v960 = vcvt.s32.f32 %v656
    %v961 = vcvt.s32.f32 %v657
    %v962 = vcvt.s32.f32 %v658
    %v963 = vcvt.s32.f32 %v659
    %v964 = vcvt.s32.f32 %v660
    %v965 = vcvt.s32.f32 %v661
    %v966 = vcvt.s32.f32 %v662
    %v967 = vcvt.s32.f32 %v663
    %v968 = vcvt.s32.f32 %v664
    %v969 = vcvt.s32.f32 %v665
    %v970 = vcvt.s32.f32 %v666
    %v971 = vcvt.s32.f32 %v667
    %v972 = vcvt.s32.f32 %v668
    %v973 = vcvt.s32.f32 %v669
    %v974 = vcvt.s32.f32 %v670
    %v975 = vcvt.s32.f32 %v671
    %v976 = vcvt.s32.f32 %v672
    %v977 = vcvt.s32.f32 %v673
    %v978 = vcvt.s32.f32 %v674
    %v979 = vcvt.s32.f32 %v675
    %v980 = vcvt.s32.f32 %v676
    %v981 = vcvt.s32.f32 %v677
    %v982 = vcvt.s32.f32 %v678
    %v983 = vcvt.s32.f32 %v679
    %v984 = vcvt.s32.f32 %v680
    %v985 = vcvt.s32.f32 %v681
    %v986 = vcvt.s32.f32 %v682
    %v987 = vcvt.s32.f32 %v683
    %v988 = vcvt.s32.f32 %v684
    %v989 = vcvt.s32.f32 %v685
    %v990 = vcvt.s32.f32 %v686
    %v991 = vcvt.s32.f32 %v687
    %v992 = vcvt.s32.f32 %v688
    %v993 = vcvt.s32.f32 %v689
    %v994 = vcvt.s32.f32 %v690
    %v995 = vcvt.s32.f32 %v691
    %v996 = vcvt.s32.f32 %v692
    %v997 = vcvt.s32.f32 %v693
    %v998 = vcvt.s32.f32 %v694
    %v999 = vcvt.s32.f32 %v695
    %v1000 = vcvt.s32.f32 %v696
    %v1001 = vcvt.s32.f32 %v697
    %v1002 = vcvt.s32.f32 %v698
    %v1003 = vcvt.s32.f32 %v699
    %v1004 = vcvt.s32.f32 %v700
    %v1005 = vcvt.s32.f32 %v701
    %v1006 = vcvt.s32.f32 %v702
    %v1007 = vcvt.s32.f32 %v703
    %v1008 = vcvt.s32.f32 %v704
    %v1009 = vcvt.s32.f32 %v705
    %v1010 = vcvt.s32.f32 %v706
    %v1011 = vmul.f32 %v707, 0.003921569
    %v1012 = vmul.f32 %v708, 0.003921569
    %v1013 = vmul.f32 %v709, 0.003921569
    %v1014 = vmul.f32 %v710, 0.003921569
    %v1015 = vmul.f32 %v711, 0.003921569
    %v1016 = vmul.f32 %v712, 0.003921569
    %v1017 = vmul.f32 %v713, 0.003921569
    %v1018 = vmul.f32 %v714, 0.003921569
    %v1019 = vmul.f32 %v715, 0.003921569
    %v1020 = vmul.f32 %v716, 0.003921569
    %v1021 = vmul.f32 %v717, 0.003921569
    %v1022 = vmul.f32 %v718, 0.003921569
    %v1023 = vmul.f32 %v719, 0.003921569
    %v1024 = vmul.f32 %v720, 0.003921569
    %v1025 = vmul.f32 %v721, 0.003921569
    %v1026 = vmul.f32 %v722, 0.003921569
    %v1027 = vmul.f32 %v723, 0.003921569
    %v1028 = vmul.f32 %v724, 0.003921569
    %v1029 = vmul.f32 %v725, 0.003921569
    %v1030 = vmul.f32 %v726, 0.003921569
    %v1031 = vmul.f32 %v727, 0.003921569
    %v1032 = vmul.f32 %v728, 0.003921569
    %v1033 = vmul.f32 %v729, 0.003921569
    %v1034 = vmul.f32 %v730, 0.003921569
    %v1035 = vmul.f32 %v731, 0.003921569
    %v1036 = vmul.f32 %v732, 0.003921569
    %v1037 = vmul.f32 %v733, 0.003921569
    %v1038 = vmul.f32 %v734, 0.003921569
    %v1039 = vmul.f32 %v735, 0.003921569
    %v1040 = vmul.f32 %v736, 0.003921569
    %v1041 = vmul.f32 %v737, 0.003921569
    %v1042 = vmul.f32 %v738, 0.003921569
    %v1043 = vmul.f32 %v739, 0.003921569
    %v1044 = vmul.f32 %v740, 0.003921569
    %v1045 = vmul.f32 %v741, 0.003921569
    %v1046 = vmul.f32 %v742, 0.003921569
    %v1047 = vmul.f32 %v743, 0.003921569
    %v1048 = vmul.f32 %v744, 0.003921569
    %v1049 = vmul.f32 %v745, 0.003921569
    %v1050 = vmul.f32 %v746, 0.003921569
    %v1051 = vmul.f32 %v747, 0.003921569
    %v1052 = vmul.f32 %v748, 0.003921569
    %v1053 = vmul.f32 %v749, 0.003921569
    %v1054 = vmul.f32 %v750, 0.003921569
    %v1055 = vmul.f32 %v751, 0.003921569
    %v1056 = vmul.f32 %v752, 0.003921569
    %v1057 = vmul.f32 %v753, 0.003921569
    %v1058 = vmul.f32 %v754, 0.003921569
    %v1059 = vmul.f32 %v755, 0.003921569
    %v1060 = vmul.f32 %v756, 0.003921569
    %v1061 = vmul.f32 %v757, 0.003921569
    %v1062 = vmul.f32 %v758, 0.003921569
    %v1063 = vmul.f32 %v759, 0.003921569
    %v1064 = vmul.f32 %v760, 0.003921569
    %v1065 = vmul.f32 %v761, 0.003921569
    %v1066 = vmul.f32 %v762, 0.003921569
    %v1067 = vmul.f32 %v763, 0.003921569
    %v1068 = vmul.f32 %v764, 0.003921569
    %v1069 = vmul.f32 %v765, 0.003921569
    %v1070 = vmul.f32 %v766, 0.003921569
    %v1071 = vmul.f32 %v767, 0.003921569
    %v1072 = vmul.f32 %v768, 0.003921569
    %v1073 = vmul.f32 %v769, 0.003921569
    %v1074 = vmul.f32 %v770, 0.003921569
    %v1075 = vmul.f32 %v771, 0.003921569
    %v1076 = vmul.f32 %v772, 0.003921569
    %v1077 = vmul.f32 %v773, 0.003921569
    %v1078 = vmul.f32 %v774, 0.003921569
    %v1079 = vmul.f32 %v775, 0.003921569
    %v1080 = vmul.f32 %v776, 0.003921569
    %v1081 = vmul.f32 %v777, 0.003921569
    %v1082 = vmul.f32 %v778, 0.003921569
    %v1083 = vmul.f32 %v779, 0.003921569
    %v1084 = vmul.f32 %v780, 0.003921569
    %v1085 = vmul.f32 %v781, 0.003921569
    %v1086 = vmul.f32 %v782, 0.003921569
    %v1087 = vmul.f32 %v783, 0.003921569
    %v1088 = vmul.f32 %v784, 0.003921569
    %v1089 = vmul.f32 %v785, 0.003921569
    %v1090 = vmul.f32 %v786, 0.003921569
    %v1091 = vmul.f32 %v787, 0.003921569
    %v1092 = vmul.f32 %v788, 0.003921569
    %v1093 = vmul.f32 %v789, 0.003921569
    %v1094 = vmul.f32 %v790, 0.003921569
    %v1095 = vmul.f32 %v791, 0.003921569
    %v1096 = vmul.f32 %v792, 0.003921569
    %v1097 = vmul.f32 %v793, 0.003921569
    %v1098 = vmul.f32 %v794, 0.003921569
    %v1099 = vmul.f32 %v795, 0.003921569
    %v1100 = vmul.f32 %v796, 0.003921569
    %v1101 = vmul.f32 %v797, 0.003921569
    %v1102 = vmul.f32 %v798, 0.003921569
    %v1103 = vmul.f32 %v799, 0.003921569
    %v1104 = vmul.f32 %v800, 0.003921569
    %v1105 = vmul.f32 %v801, 0.003921569
    %v1106 = vmul.f32 %v802, 0.003921569
    %v1107 = vmul.f32 %v803, 0.003921569
    %v1108 = vmul.f32 %v804, 0.003921569
    %v1109 = vmul.f32 %v805, 0.003921569
    %v1110 = vmul.f32 %v806, 0.003921569
    %v1111 = vmul.f32 %v807, 0.003921569
    %v1112 = vmul.f32 %v808, 0.003921569
    %v1113 = vmul.f32 %v809, 0.003921569
    %v1114 = vmul.f32 %v810, 0.003921569
    %v1115 = vmul.f32 %v811, 0.003921569
    %v1116 = vmul.f32 %v812, 0.003921569
    %v1117 = vmul.f32 %v813, 0.003921569
    %v1118 = vmul.f32 %v814, 0.003921569
    %v1119 = vmul.f32 %v815, 0.003921569
    %v1120 = vmul.f32 %v816, 0.003921569
    %v1121 = vmul.f32 %v817, 0.003921569
    %v1122 = vmul.f32 %v818, 0.003921569
    %v1123 = vmul.f32 %v819, 0.003921569
    %v1124 = vmul.f32 %v820, 0.003921569
    %v1125 = vmul.f32 %v821, 0.003921569
    %v1126 = vmul.f32 %v822, 0.003921569
    %v1127 = vmul.f32 %v823, 0.003921569
    %v1128 = vmul.f32 %v824, 0.003921569
    %v1129 = vmul.f32 %v825, 0.003921569
    %v1130 = vmul.f32 %v826, 0.003921569
    %v1131 = vmul.f32 %v827, 0.003921569
    %v1132 = vmul.f32 %v828, 0.003921569
    %v1133 = vmul.f32 %v829, 0.003921569
    %v1134 = vmul.f32 %v830, 0.003921569
    %v1135 = vmul.f32 %v831, 0.003921569
    %v1136 = vmul.f32 %v832, 0.003921569
    %v1137 = vmul.f32 %v833, 0.003921569
    %v1138 = vmul.f32 %v834, 0.003921569
    %v1139 = vmul.f32 %v835, 0.003921569
    %v1140 = vmul.f32 %v836, 0.003921569
    %v1141 = vmul.f32 %v837, 0.003921569
    %v1142 = vmul.f32 %v838, 0.003921569
    %v1143 = vmul.f32 %v839, 0.003921569
    %v1144 = vmul.f32 %v840, 0.003921569
    %v1145 = vmul.f32 %v841, 0.003921569
    %v1146 = vmul.f32 %v842, 0.003921569
    %v1147 = vmul.f32 %v843, 0.003921569
    %v1148 = vmul.f32 %v844, 0.003921569
    %v1149 = vmul.f32 %v845, 0.003921569
    %v1150 = vmul.f32 %v846, 0.003921569
    %v1151 = vmul.f32 %v847, 0.003921569
    %v1152 = vmul.f32 %v848, 0.003921569
    %v1153 = vmul.f32 %v849, 0.003921569
    %v1154 = vmul.f32 %v850, 0.003921569
    %v1155 = vmul.f32 %v851, 0.003921569
    %v1156 = vmul.f32 %v852, 0.003921569
    %v1157 = vmul.f32 %v853, 0.003921569
    %v1158 = vmul.f32 %v854, 0.003921569
    %v1159 = vmul.f32 %v855, 0.003921569
    %v1160 = vmul.f32 %v856, 0.003921569
    %v1161 = vmul.f32 %v857, 0.003921569
    %v1162 = vmul.f32 %v858, 0.003921569
    %v1163 = vmul.f32 %v859, 0.003921569
    %v1164 = vmul.f32 %v860, 0.003921569
    %v1165 = vmul.f32 %v861, 0.003921569
    %v1166 = vmul.f32 %v862, 0.003921569
    %v1167 = vmul.f32 %v863, 0.003921569
    %v1168 = vmul.f32 %v864, 0.003921569
    %v1169 = vmul.f32 %v865, 0.003921569
    %v1170 = vmul.f32 %v866, 0.003921569
    %v1171 = vmul.f32 %v867, 0.003921569
    %v1172 = vmul.f32 %v868, 0.003921569
    %v1173 = vmul.f32 %v869, 0.003921569
    %v1174 = vmul.f32 %v870, 0.003921569
    %v1175 = vmul.f32 %v871, 0.003921569
    %v1176 = vmul.f32 %v872, 0.003921569
    %v1177 = vmul.f32 %v873, 0.003921569
    %v1178 = vmul.f32 %v874, 0.003921569
    %v1179 = vmul.f32 %v875, 0.003921569
    %v1180 = vmul.f32 %v876, 0.003921569
    %v1181 = vmul.f32 %v877, 0.003921569
    %v1182 = vmul.f32 %v878, 0.003921569
    %v1183 = vmul.f32 %v879, 0.003921569
    %v1184 = vmul.f32 %v880, 0.003921569
    %v1185 = vmul.f32 %v881, 0.003921569
    %v1186 = vmul.f32 %v882, 0.003921569
    %v1187 = vmul.f32 %v883, 0.003921569
    %v1188 = vmul.f32 %v884, 0.003921569
    %v1189 = vmul.f32 %v885, 0.003921569
    %v1190 = vmul.f32 %v886, 0.003921569
    %v1191 = vmul.f32 %v887, 0.003921569
    %v1192 = vmul.f32 %v888, 0.003921569
    %v1193 = vmul.f32 %v889, 0.003921569
    %v1194 = vmul.f32 %v890, 0.003921569
    %v1195 = vmul.f32 %v891, 0.003921569
    %v1196 = vmul.f32 %v892, 0.003921569
    %v1197 = vmul.f32 %v893, 0.003921569
    %v1198 = vmul.f32 %v894, 0.003921569
    %v1199 = vmul.f32 %v895, 0.003921569
    %v1200 = vmul.f32 %v896, 0.003921569
    %v1201 = vmul.f32 %v897, 0.003921569
    %v1202 = vmul.f32 %v898, 0.003921569
    %v1203 = vmul.f32 %v899, 0.003921569
    %v1204 = vmul.f32 %v900, 0.003921569
    %v1205 = vmul.f32 %v901, 0.003921569
    %v1206 = vmul.f32 %v902, 0.003921569
    %v1207 = vmul.f32 %v903, 0.003921569
    %v1208 = vmul.f32 %v904, 0.003921569
    %v1209 = vmul.f32 %v905, 0.003921569
    %v1210 = vmul.f32 %v906, 0.003921569
    %v1211 = vmul.f32 %v907, 0.003921569
    %v1212 = vmul.f32 %v908, 0.003921569
    %v1213 = vmul.f32 %v909, 0.003921569
    %v1214 = vmul.f32 %v910, 0.003921569
    %v1215 = vmul.f32 %v911, 0.003921569
    %v1216 = vmul.f32 %v912, 0.003921569
    %v1217 = vmul.f32 %v913, 0.003921569
    %v1218 = vmul.f32 %v914, 0.003921569
    %v1219 = vmul.f32 %v915, 0.003921569
    %v1220 = vmul.f32 %v916, 0.003921569
    %v1221 = vmul.f32 %v917, 0.003921569
    %v1222 = vmul.f32 %v918, 0.003921569
    %v1223 = vmul.f32 %v919, 0.003921569
    %v1224 = vmul.f32 %v920, 0.003921569
    %v1225 = vmul.f32 %v921, 0.003921569
    %v1226 = vmul.f32 %v922, 0.003921569
    %v1227 = vmul.f32 %v923, 0.003921569
    %v1228 = vmul.f32 %v924, 0.003921569
    %v1229 = vmul.f32 %v925, 0.003921569
    %v1230 = vmul.f32 %v926, 0.003921569
    %v1231 = vmul.f32 %v927, 0.003921569
    %v1232 = vmul.f32 %v928, 0.003921569
    %v1233 = vmul.f32 %v929, 0.003921569
    %v1234 = vmul.f32 %v930, 0.003921569
    %v1235 = vmul.f32 %v931, 0.003921569
    %v1236 = vmul.f32 %v932, 0.003921569
    %v1237 = vmul.f32 %v933, 0.003921569
    %v1238 = vmul.f32 %v934, 0.003921569
    %v1239 = vmul.f32 %v935, 0.003921569
    %v1240 = vmul.f32 %v936, 0.003921569
    %v1241 = vmul.f32 %v937, 0.003921569
    %v1242 = vmul.f32 %v938, 0.003921569
    %v1243 = vmul.f32 %v939, 0.003921569
    %v1244 = vmul.f32 %v940, 0.003921569
    %v1245 = vmul.f32 %v941, 0.003921569
    %v1246 = vmul.f32 %v942, 0.003921569
    %v1247 = vmul.f32 %v943, 0.003921569
    %v1248 = vmul.f32 %v944, 0.003921569
    %v1249 = vmul.f32 %v945, 0.003921569
    %v1250 = vmul.f32 %v946, 0.003921569
    %v1251 = vmul.f32 %v947, 0.003921569
    %v1252 = vmul.f32 %v948, 0.003921569
    %v1253 = vmul.f32 %v949, 0.003921569
    %v1254 = vmul.f32 %v950, 0.003921569
    %v1255 = vmul.f32 %v951, 0.003921569
    %v1256 = vmul.f32 %v952, 0.003921569
    %v1257 = vmul.f32 %v953, 0.003921569
    %v1258 = vmul.f32 %v954, 0.003921569
    %v1259 = vmul.f32 %v955, 0.003921569
    %v1260 = vmul.f32 %v956, 0.003921569
    %v1261 = vmul.f32 %v957, 0.003921569
    %v1262 = vmul.f32 %v958, 0.003921569
    %v1263 = vmul.f32 %v959, 0.003921569
    %v1264 = vmul.f32 %v960, 0.003921569
    %v1265 = vmul.f32 %v961, 0.003921569
    %v1266 = vmul.f32 %v962, 0.003921569
    %v1267 = vmul.f32 %v963, 0.003921569
    %v1268 = vmul.f32 %v964, 0.003921569
    %v1269 = vmul.f32 %v965, 0.003921569
    %v1270 = vmul.f32 %v966, 0.003921569
    %v1271 = vmul.f32 %v967, 0.003921569
    %v1272 = vmul.f32 %v968, 0.003921569
    %v1273 = vmul.f32 %v969, 0.003921569
    %v1274 = vmul.f32 %v970, 0.003921569
    %v1275 = vmul.f32 %v971, 0.003921569
    %v1276 = vmul.f32 %v972, 0.003921569
    %v1277 = vmul.f32 %v973, 0.003921569
    %v1278 = vmul.f32 %v974, 0.003921569
    %v1279 = vmul.f32 %v975, 0.003921569
    %v1280 = vmul.f32 %v976, 0.003921569
    %v1281 = vmul.f32 %v977, 0.003921569
    %v1282 = vmul.f32 %v978, 0.003921569
    %v1283 = vmul.f32 %v979, 0.003921569
    %v1284 = vmul.f32 %v980, 0.003921569
    %v1285 = vmul.f32 %v981, 0.003921569
    %v1286 = vmul.f32 %v982, 0.003921569
    %v1287 = vmul.f32 %v983, 0.003921569
    %v1288 = vmul.f32 %v984, 0.003921569
    %v1289 = vmul.f32 %v985, 0.003921569
    %v1290 = vmul.f32 %v986, 0.003921569
    %v1291 = vmul.f32 %v987, 0.003921569
    %v1292 = vmul.f32 %v988, 0.003921569
    %v1293 = vmul.f32 %v989, 0.003921569
    %v1294 = vmul.f32 %v990, 0.003921569
    %v1295 = vmul.f32 %v991, 0.003921569
    %v1296 = vmul.f32 %v992, 0.003921569
    %v1297 = vmul.f32 %v993, 0.003921569
    %v1298 = vmul.f32 %v994, 0.003921569
    %v1299 = vmul.f32 %v995, 0.003921569
    %v1300 = vmul.f32 %v996, 0.003921569
    %v1301 = vmul.f32 %v997, 0.003921569
    %v1302 = vmul.f32 %v998, 0.003921569
    %v1303 = vmul.f32 %v999, 0.003921569
    %v1304 = vmul.f32 %v1000, 0.003921569
    %v1305 = vmul.f32 %v1001, 0.003921569
    %v1306 = vmul.f32 %v1002, 0.003921569
    %v1307 = vmul.f32 %v1003, 0.003921569
    %v1308 = vmul.f32 %v1004, 0.003921569
    %v1309 = vmul.f32 %v1005, 0.003921569
    %v1310 = vmul.f32 %v1006, 0.003921569
    %v1311 = vmul.f32 %v1007, 0.003921569
    %v1312 = vmul.f32 %v1008, 0.003921569
    %v1313 = vmul.f32 %v1009, 0.003921569
    %v1314 = vmul.f32 %v1010, 0.003921569
    %1315 = vst [vmem:[#allocation5] sm:$0xff] %v1011
    %1316 = vst [vmem:[#allocation5 + $0x8] sm:$0xff] %v1012
    %1317 = vst [vmem:[#allocation5 + $0x10] sm:$0xff] %v1013
    %1318 = vst [vmem:[#allocation5 + $0x18] sm:$0xff] %v1014
    %1319 = vst [vmem:[#allocation5 + $0x20] sm:$0xff] %v1015
    %1320 = vst [vmem:[#allocation5 + $0x28] sm:$0xff] %v1016
    %1321 = vst [vmem:[#allocation5 + $0x30] sm:$0xff] %v1017
    %1322 = vst [vmem:[#allocation5 + $0x38] sm:$0xff] %v1018
    %1323 = vst [vmem:[#allocation5 + $0x40] sm:$0xff] %v1019
    %1324 = vst [vmem:[#allocation5 + $0x48] sm:$0xff] %v1020
    %1325 = vst [vmem:[#allocation5 + $0x50] sm:$0xff] %v1021
    %1326 = vst [vmem:[#allocation5 + $0x58] sm:$0xff] %v1022
    %1327 = vst [vmem:[#allocation5 + $0x60] sm:$0xff] %v1023
    %1328 = vst [vmem:[#allocation5 + $0x68] sm:$0xff] %v1024
    %1329 = vst [vmem:[#allocation5 + $0x70] sm:$0xff] %v1025
    %1330 = vst [vmem:[#allocation5 + $0x78] sm:$0xff] %v1026
    %1331 = vst [vmem:[#allocation5 + $0x80] sm:$0xff] %v1027
    %1332 = vst [vmem:[#allocation5 + $0x88] sm:$0xff] %v1028
    %1333 = vst [vmem:[#allocation5 + $0x90] sm:$0xff] %v1029
    %1334 = vst [vmem:[#allocation5 + $0x98] sm:$0xff] %v1030
    %1335 = vst [vmem:[#allocation5 + $0xa0] sm:$0xff] %v1031
    %1336 = vst [vmem:[#allocation5 + $0xa8] sm:$0xff] %v1032
    %1337 = vst [vmem:[#allocation5 + $0xb0] sm:$0xff] %v1033
    %1338 = vst [vmem:[#allocation5 + $0xb8] sm:$0xff] %v1034
    %1339 = vst [vmem:[#allocation5 + $0xc0] sm:$0xff] %v1035
    %1340 = vst [vmem:[#allocation5 + $0xc8] sm:$0xff] %v1036
    %1341 = vst [vmem:[#allocation5 + $0xd0] sm:$0xff] %v1037
    %1342 = vst [vmem:[#allocation5 + $0xd8] sm:$0xff] %v1038
    %1343 = vst [vmem:[#allocation5 + $0xe0] sm:$0xff] %v1039
    %1344 = vst [vmem:[#allocation5 + $0xe8] sm:$0xff] %v1040
    %1345 = vst [vmem:[#allocation5 + $0xf0] sm:$0xff] %v1041
    %1346 = vst [vmem:[#allocation5 + $0xf8] sm:$0xff] %v1042
    %1347 = vst [vmem:[#allocation5 + $0x100] sm:$0xff] %v1043
    %1348 = vst [vmem:[#allocation5 + $0x108] sm:$0xff] %v1044
    %1349 = vst [vmem:[#allocation5 + $0x110] sm:$0xff] %v1045
    %1350 = vst [vmem:[#allocation5 + $0x118] sm:$0xff] %v1046
    %1351 = vst [vmem:[#allocation5 + $0x120] sm:$0xff] %v1047
    %1352 = vst [vmem:[#allocation5 + $0x128] sm:$0xff] %v1048
    %1353 = vst [vmem:[#allocation5 + $0x130] sm:$0xff] %v1049
    %1354 = vst [vmem:[#allocation5 + $0x138] sm:$0xff] %v1050
    %1355 = vst [vmem:[#allocation5 + $0x140] sm:$0xff] %v1051
    %1356 = vst [vmem:[#allocation5 + $0x148] sm:$0xff] %v1052
    %1357 = vst [vmem:[#allocation5 + $0x150] sm:$0xff] %v1053
    %1358 = vst [vmem:[#allocation5 + $0x158] sm:$0xff] %v1054
    %1359 = vst [vmem:[#allocation5 + $0x160] sm:$0xff] %v1055
    %1360 = vst [vmem:[#allocation5 + $0x168] sm:$0xff] %v1056
    %1361 = vst [vmem:[#allocation5 + $0x170] sm:$0xff] %v1057
    %1362 = vst [vmem:[#allocation5 + $0x178] sm:$0xff] %v1058
    %1363 = vst [vmem:[#allocation5 + $0x180] sm:$0xff] %v1059
    %1364 = vst [vmem:[#allocation5 + $0x188] sm:$0xff] %v1060
    %1365 = vst [vmem:[#allocation5 + $0x190] sm:$0xff] %v1061
    %1366 = vst [vmem:[#allocation5 + $0x198] sm:$0xff] %v1062
    %1367 = vst [vmem:[#allocation5 + $0x1a0] sm:$0xff] %v1063
    %1368 = vst [vmem:[#allocation5 + $0x1a8] sm:$0xff] %v1064
    %1369 = vst [vmem:[#allocation5 + $0x1b0] sm:$0xff] %v1065
    %1370 = vst [vmem:[#allocation5 + $0x1b8] sm:$0xff] %v1066
    %1371 = vst [vmem:[#allocation5 + $0x1c0] sm:$0xff] %v1067
    %1372 = vst [vmem:[#allocation5 + $0x1c8] sm:$0xff] %v1068
    %1373 = vst [vmem:[#allocation5 + $0x1d0] sm:$0xff] %v1069
    %1374 = vst [vmem:[#allocation5 + $0x1d8] sm:$0xff] %v1070
    %1375 = vst [vmem:[#allocation5 + $0x1e0] sm:$0xff] %v1071
    %1376 = vst [vmem:[#allocation5 + $0x1e8] sm:$0xff] %v1072
    %1377 = vst [vmem:[#allocation5 + $0x1f0] sm:$0xff] %v1073
    %1378 = vst [vmem:[#allocation5 + $0x1f8] sm:$0xff] %v1074
    %1379 = vst [vmem:[#allocation5 + $0x200] sm:$0xff] %v1075
    %1380 = vst [vmem:[#allocation5 + $0x208] sm:$0xff] %v1076
    %1381 = vst [vmem:[#allocation5 + $0x210] sm:$0xff] %v1077
    %1382 = vst [vmem:[#allocation5 + $0x218] sm:$0xff] %v1078
    %1383 = vst [vmem:[#allocation5 + $0x220] sm:$0xff] %v1079
    %1384 = vst [vmem:[#allocation5 + $0x228] sm:$0xff] %v1080
    %1385 = vst [vmem:[#allocation5 + $0x230] sm:$0xff] %v1081
    %1386 = vst [vmem:[#allocation5 + $0x238] sm:$0xff] %v1082
    %1387 = vst [vmem:[#allocation5 + $0x240] sm:$0xff] %v1083
    %1388 = vst [vmem:[#allocation5 + $0x248] sm:$0xff] %v1084
    %1389 = vst [vmem:[#allocation5 + $0x250] sm:$0xff] %v1085
    %1390 = vst [vmem:[#allocation5 + $0x258] sm:$0xff] %v1086
    %1391 = vst [vmem:[#allocation5 + $0x260] sm:$0xff] %v1087
    %1392 = vst [vmem:[#allocation5 + $0x268] sm:$0xff] %v1088
    %1393 = vst [vmem:[#allocation5 + $0x270] sm:$0xff] %v1089
    %1394 = vst [vmem:[#allocation5 + $0x278] sm:$0xff] %v1090
    %1395 = vst [vmem:[#allocation5 + $0x280] sm:$0xff] %v1091
    %1396 = vst [vmem:[#allocation5 + $0x288] sm:$0xff] %v1092
    %1397 = vst [vmem:[#allocation5 + $0x290] sm:$0xff] %v1093
    %1398 = vst [vmem:[#allocation5 + $0x298] sm:$0xff] %v1094
    %1399 = vst [vmem:[#allocation5 + $0x2a0] sm:$0xff] %v1095
    %1400 = vst [vmem:[#allocation5 + $0x2a8] sm:$0xff] %v1096
    %1401 = vst [vmem:[#allocation5 + $0x2b0] sm:$0xff] %v1097
    %1402 = vst [vmem:[#allocation5 + $0x2b8] sm:$0xff] %v1098
    %1403 = vst [vmem:[#allocation5 + $0x2c0] sm:$0xff] %v1099
    %1404 = vst [vmem:[#allocation5 + $0x2c8] sm:$0xff] %v1100
    %1405 = vst [vmem:[#allocation5 + $0x2d0] sm:$0xff] %v1101
    %1406 = vst [vmem:[#allocation5 + $0x2d8] sm:$0xff] %v1102
    %1407 = vst [vmem:[#allocation5 + $0x2e0] sm:$0xff] %v1103
    %1408 = vst [vmem:[#allocation5 + $0x2e8] sm:$0xff] %v1104
    %1409 = vst [vmem:[#allocation5 + $0x2f0] sm:$0xff] %v1105
    %1410 = vst [vmem:[#allocation5 + $0x2f8] sm:$0xff] %v1106
    %1411 = vst [vmem:[#allocation5 + $0x300] sm:$0xff] %v1107
    %1412 = vst [vmem:[#allocation5 + $0x308] sm:$0xff] %v1108
    %1413 = vst [vmem:[#allocation5 + $0x310] sm:$0xff] %v1109
    %1414 = vst [vmem:[#allocation5 + $0x318] sm:$0xff] %v1110
    %1415 = vst [vmem:[#allocation5 + $0x320] sm:$0xff] %v1111
    %1416 = vst [vmem:[#allocation5 + $0x328] sm:$0xff] %v1112
    %1417 = vst [vmem:[#allocation5 + $0x330] sm:$0xff] %v1113
    %1418 = vst [vmem:[#allocation5 + $0x338] sm:$0xff] %v1114
    %1419 = vst [vmem:[#allocation5 + $0x340] sm:$0xff] %v1115
    %1420 = vst [vmem:[#allocation5 + $0x348] sm:$0xff] %v1116
    %1421 = vst [vmem:[#allocation5 + $0x350] sm:$0xff] %v1117
    %1422 = vst [vmem:[#allocation5 + $0x358] sm:$0xff] %v1118
    %1423 = vst [vmem:[#allocation5 + $0x360] sm:$0xff] %v1119
    %1424 = vst [vmem:[#allocation5 + $0x368] sm:$0xff] %v1120
    %1425 = vst [vmem:[#allocation5 + $0x370] sm:$0xff] %v1121
    %1426 = vst [vmem:[#allocation5 + $0x378] sm:$0xff] %v1122
    %1427 = vst [vmem:[#allocation5 + $0x380] sm:$0xff] %v1123
    %1428 = vst [vmem:[#allocation5 + $0x388] sm:$0xff] %v1124
    %1429 = vst [vmem:[#allocation5 + $0x390] sm:$0xff] %v1125
    %1430 = vst [vmem:[#allocation5 + $0x398] sm:$0xff] %v1126
    %1431 = vst [vmem:[#allocation5 + $0x3a0] sm:$0xff] %v1127
    %1432 = vst [vmem:[#allocation5 + $0x3a8] sm:$0xff] %v1128
    %1433 = vst [vmem:[#allocation5 + $0x3b0] sm:$0xff] %v1129
    %1434 = vst [vmem:[#allocation5 + $0x3b8] sm:$0xff] %v1130
    %1435 = vst [vmem:[#allocation5 + $0x3c0] sm:$0xff] %v1131
    %1436 = vst [vmem:[#allocation5 + $0x3c8] sm:$0xff] %v1132
    %1437 = vst [vmem:[#allocation5 + $0x3d0] sm:$0xff] %v1133
    %1438 = vst [vmem:[#allocation5 + $0x3d8] sm:$0xff] %v1134
    %1439 = vst [vmem:[#allocation5 + $0x3e0] sm:$0xff] %v1135
    %1440 = vst [vmem:[#allocation5 + $0x3e8] sm:$0xff] %v1136
    %1441 = vst [vmem:[#allocation5 + $0x3f0] sm:$0xff] %v1137
    %1442 = vst [vmem:[#allocation5 + $0x3f8] sm:$0xff] %v1138
    %1443 = vst [vmem:[#allocation5 + $0x400] sm:$0xff] %v1139
    %1444 = vst [vmem:[#allocation5 + $0x408] sm:$0xff] %v1140
    %1445 = vst [vmem:[#allocation5 + $0x410] sm:$0xff] %v1141
    %1446 = vst [vmem:[#allocation5 + $0x418] sm:$0xff] %v1142
    %1447 = vst [vmem:[#allocation5 + $0x420] sm:$0xff] %v1143
    %1448 = vst [vmem:[#allocation5 + $0x428] sm:$0xff] %v1144
    %1449 = vst [vmem:[#allocation5 + $0x430] sm:$0xff] %v1145
    %1450 = vst [vmem:[#allocation5 + $0x438] sm:$0xff] %v1146
    %1451 = vst [vmem:[#allocation5 + $0x440] sm:$0xff] %v1147
    %1452 = vst [vmem:[#allocation5 + $0x448] sm:$0xff] %v1148
    %1453 = vst [vmem:[#allocation5 + $0x450] sm:$0xff] %v1149
    %1454 = vst [vmem:[#allocation5 + $0x458] sm:$0xff] %v1150
    %1455 = vst [vmem:[#allocation5 + $0x460] sm:$0xff] %v1151
    %1456 = vst [vmem:[#allocation5 + $0x468] sm:$0xff] %v1152
    %1457 = vst [vmem:[#allocation5 + $0x470] sm:$0xff] %v1153
    %1458 = vst [vmem:[#allocation5 + $0x478] sm:$0xff] %v1154
    %1459 = vst [vmem:[#allocation5 + $0x480] sm:$0xff] %v1155
    %1460 = vst [vmem:[#allocation5 + $0x488] sm:$0xff] %v1156
    %1461 = vst [vmem:[#allocation5 + $0x490] sm:$0xff] %v1157
    %1462 = vst [vmem:[#allocation5 + $0x498] sm:$0xff] %v1158
    %1463 = vst [vmem:[#allocation5 + $0x4a0] sm:$0xff] %v1159
    %1464 = vst [vmem:[#allocation5 + $0x4a8] sm:$0xff] %v1160
    %1465 = vst [vmem:[#allocation5 + $0x4b0] sm:$0xff] %v1161
    %1466 = vst [vmem:[#allocation5 + $0x4b8] sm:$0xff] %v1162
    %1467 = vst [vmem:[#allocation5 + $0x4c0] sm:$0xff] %v1163
    %1468 = vst [vmem:[#allocation5 + $0x4c8] sm:$0xff] %v1164
    %1469 = vst [vmem:[#allocation5 + $0x4d0] sm:$0xff] %v1165
    %1470 = vst [vmem:[#allocation5 + $0x4d8] sm:$0xff] %v1166
    %1471 = vst [vmem:[#allocation5 + $0x4e0] sm:$0xff] %v1167
    %1472 = vst [vmem:[#allocation5 + $0x4e8] sm:$0xff] %v1168
    %1473 = vst [vmem:[#allocation5 + $0x4f0] sm:$0xff] %v1169
    %1474 = vst [vmem:[#allocation5 + $0x4f8] sm:$0xff] %v1170
    %1475 = vst [vmem:[#allocation5 + $0x500] sm:$0xff] %v1171
    %1476 = vst [vmem:[#allocation5 + $0x508] sm:$0xff] %v1172
    %1477 = vst [vmem:[#allocation5 + $0x510] sm:$0xff] %v1173
    %1478 = vst [vmem:[#allocation5 + $0x518] sm:$0xff] %v1174
    %1479 = vst [vmem:[#allocation5 + $0x520] sm:$0xff] %v1175
    %1480 = vst [vmem:[#allocation5 + $0x528] sm:$0xff] %v1176
    %1481 = vst [vmem:[#allocation5 + $0x530] sm:$0xff] %v1177
    %1482 = vst [vmem:[#allocation5 + $0x538] sm:$0xff] %v1178
    %1483 = vst [vmem:[#allocation5 + $0x540] sm:$0xff] %v1179
    %1484 = vst [vmem:[#allocation5 + $0x548] sm:$0xff] %v1180
    %1485 = vst [vmem:[#allocation5 + $0x550] sm:$0xff] %v1181
    %1486 = vst [vmem:[#allocation5 + $0x558] sm:$0xff] %v1182
    %1487 = vst [vmem:[#allocation5 + $0x560] sm:$0xff] %v1183
    %1488 = vst [vmem:[#allocation5 + $0x568] sm:$0xff] %v1184
    %1489 = vst [vmem:[#allocation5 + $0x570] sm:$0xff] %v1185
    %1490 = vst [vmem:[#allocation5 + $0x578] sm:$0xff] %v1186
    %1491 = vst [vmem:[#allocation5 + $0x580] sm:$0xff] %v1187
    %1492 = vst [vmem:[#allocation5 + $0x588] sm:$0xff] %v1188
    %1493 = vst [vmem:[#allocation5 + $0x590] sm:$0xff] %v1189
    %1494 = vst [vmem:[#allocation5 + $0x598] sm:$0xff] %v1190
    %1495 = vst [vmem:[#allocation5 + $0x5a0] sm:$0xff] %v1191
    %1496 = vst [vmem:[#allocation5 + $0x5a8] sm:$0xff] %v1192
    %1497 = vst [vmem:[#allocation5 + $0x5b0] sm:$0xff] %v1193
    %1498 = vst [vmem:[#allocation5 + $0x5b8] sm:$0xff] %v1194
    %1499 = vst [vmem:[#allocation5 + $0x5c0] sm:$0xff] %v1195
    %1500 = vst [vmem:[#allocation5 + $0x5c8] sm:$0xff] %v1196
    %1501 = vst [vmem:[#allocation5 + $0x5d0] sm:$0xff] %v1197
    %1502 = vst [vmem:[#allocation5 + $0x5d8] sm:$0xff] %v1198
    %1503 = vst [vmem:[#allocation5 + $0x5e0] sm:$0xff] %v1199
    %1504 = vst [vmem:[#allocation5 + $0x5e8] sm:$0xff] %v1200
    %1505 = vst [vmem:[#allocation5 + $0x5f0] sm:$0xff] %v1201
    %1506 = vst [vmem:[#allocation5 + $0x5f8] sm:$0xff] %v1202
    %1507 = vst [vmem:[#allocation5 + $0x600] sm:$0xff] %v1203
    %1508 = vst [vmem:[#allocation5 + $0x608] sm:$0xff] %v1204
    %1509 = vst [vmem:[#allocation5 + $0x610] sm:$0xff] %v1205
    %1510 = vst [vmem:[#allocation5 + $0x618] sm:$0xff] %v1206
    %1511 = vst [vmem:[#allocation5 + $0x620] sm:$0xff] %v1207
    %1512 = vst [vmem:[#allocation5 + $0x628] sm:$0xff] %v1208
    %1513 = vst [vmem:[#allocation5 + $0x630] sm:$0xff] %v1209
    %1514 = vst [vmem:[#allocation5 + $0x638] sm:$0xff] %v1210
    %1515 = vst [vmem:[#allocation5 + $0x640] sm:$0xff] %v1211
    %1516 = vst [vmem:[#allocation5 + $0x648] sm:$0xff] %v1212
    %1517 = vst [vmem:[#allocation5 + $0x650] sm:$0xff] %v1213
    %1518 = vst [vmem:[#allocation5 + $0x658] sm:$0xff] %v1214
    %1519 = vst [vmem:[#allocation5 + $0x660] sm:$0xff] %v1215
    %1520 = vst [vmem:[#allocation5 + $0x668] sm:$0xff] %v1216
    %1521 = vst [vmem:[#allocation5 + $0x670] sm:$0xff] %v1217
    %1522 = vst [vmem:[#allocation5 + $0x678] sm:$0xff] %v1218
    %1523 = vst [vmem:[#allocation5 + $0x680] sm:$0xff] %v1219
    %1524 = vst [vmem:[#allocation5 + $0x688] sm:$0xff] %v1220
    %1525 = vst [vmem:[#allocation5 + $0x690] sm:$0xff] %v1221
    %1526 = vst [vmem:[#allocation5 + $0x698] sm:$0xff] %v1222
    %1527 = vst [vmem:[#allocation5 + $0x6a0] sm:$0xff] %v1223
    %1528 = vst [vmem:[#allocation5 + $0x6a8] sm:$0xff] %v1224
    %1529 = vst [vmem:[#allocation5 + $0x6b0] sm:$0xff] %v1225
    %1530 = vst [vmem:[#allocation5 + $0x6b8] sm:$0xff] %v1226
    %1531 = vst [vmem:[#allocation5 + $0x6c0] sm:$0xff] %v1227
    %1532 = vst [vmem:[#allocation5 + $0x6c8] sm:$0xff] %v1228
    %1533 = vst [vmem:[#allocation5 + $0x6d0] sm:$0xff] %v1229
    %1534 = vst [vmem:[#allocation5 + $0x6d8] sm:$0xff] %v1230
    %1535 = vst [vmem:[#allocation5 + $0x6e0] sm:$0xff] %v1231
    %1536 = vst [vmem:[#allocation5 + $0x6e8] sm:$0xff] %v1232
    %1537 = vst [vmem:[#allocation5 + $0x6f0] sm:$0xff] %v1233
    %1538 = vst [vmem:[#allocation5 + $0x6f8] sm:$0xff] %v1234
    %1539 = vst [vmem:[#allocation5 + $0x700] sm:$0xff] %v1235
    %1540 = vst [vmem:[#allocation5 + $0x708] sm:$0xff] %v1236
    %1541 = vst [vmem:[#allocation5 + $0x710] sm:$0xff] %v1237
    %1542 = vst [vmem:[#allocation5 + $0x718] sm:$0xff] %v1238
    %1543 = vst [vmem:[#allocation5 + $0x720] sm:$0xff] %v1239
    %1544 = vst [vmem:[#allocation5 + $0x728] sm:$0xff] %v1240
    %1545 = vst [vmem:[#allocation5 + $0x730] sm:$0xff] %v1241
    %1546 = vst [vmem:[#allocation5 + $0x738] sm:$0xff] %v1242
    %1547 = vst [vmem:[#allocation5 + $0x740] sm:$0xff] %v1243
    %1548 = vst [vmem:[#allocation5 + $0x748] sm:$0xff] %v1244
    %1549 = vst [vmem:[#allocation5 + $0x750] sm:$0xff] %v1245
    %1550 = vst [vmem:[#allocation5 + $0x758] sm:$0xff] %v1246
    %1551 = vst [vmem:[#allocation5 + $0x760] sm:$0xff] %v1247
    %1552 = vst [vmem:[#allocation5 + $0x768] sm:$0xff] %v1248
    %1553 = vst [vmem:[#allocation5 + $0x770] sm:$0xff] %v1249
    %1554 = vst [vmem:[#allocation5 + $0x778] sm:$0xff] %v1250
    %1555 = vst [vmem:[#allocation5 + $0x780] sm:$0xff] %v1251
    %1556 = vst [vmem:[#allocation5 + $0x788] sm:$0xff] %v1252
    %1557 = vst [vmem:[#allocation5 + $0x790] sm:$0xff] %v1253
    %1558 = vst [vmem:[#allocation5 + $0x798] sm:$0xff] %v1254
    %1559 = vst [vmem:[#allocation5 + $0x7a0] sm:$0xff] %v1255
    %1560 = vst [vmem:[#allocation5 + $0x7a8] sm:$0xff] %v1256
    %1561 = vst [vmem:[#allocation5 + $0x7b0] sm:$0xff] %v1257
    %1562 = vst [vmem:[#allocation5 + $0x7b8] sm:$0xff] %v1258
    %1563 = vst [vmem:[#allocation5 + $0x7c0] sm:$0xff] %v1259
    %1564 = vst [vmem:[#allocation5 + $0x7c8] sm:$0xff] %v1260
    %1565 = vst [vmem:[#allocation5 + $0x7d0] sm:$0xff] %v1261
    %1566 = vst [vmem:[#allocation5 + $0x7d8] sm:$0xff] %v1262
    %1567 = vst [vmem:[#allocation5 + $0x7e0] sm:$0xff] %v1263
    %1568 = vst [vmem:[#allocation5 + $0x7e8] sm:$0xff] %v1264
    %1569 = vst [vmem:[#allocation5 + $0x7f0] sm:$0xff] %v1265
    %1570 = vst [vmem:[#allocation5 + $0x7f8] sm:$0xff] %v1266
    %1571 = vst [vmem:[#allocation5 + $0x800] sm:$0xff] %v1267
    %1572 = vst [vmem:[#allocation5 + $0x808] sm:$0xff] %v1268
    %1573 = vst [vmem:[#allocation5 + $0x810] sm:$0xff] %v1269
    %1574 = vst [vmem:[#allocation5 + $0x818] sm:$0xff] %v1270
    %1575 = vst [vmem:[#allocation5 + $0x820] sm:$0xff] %v1271
    %1576 = vst [vmem:[#allocation5 + $0x828] sm:$0xff] %v1272
    %1577 = vst [vmem:[#allocation5 + $0x830] sm:$0xff] %v1273
    %1578 = vst [vmem:[#allocation5 + $0x838] sm:$0xff] %v1274
    %1579 = vst [vmem:[#allocation5 + $0x840] sm:$0xff] %v1275
    %1580 = vst [vmem:[#allocation5 + $0x848] sm:$0xff] %v1276
    %1581 = vst [vmem:[#allocation5 + $0x850] sm:$0xff] %v1277
    %1582 = vst [vmem:[#allocation5 + $0x858] sm:$0xff] %v1278
    %1583 = vst [vmem:[#allocation5 + $0x860] sm:$0xff] %v1279
    %1584 = vst [vmem:[#allocation5 + $0x868] sm:$0xff] %v1280
    %1585 = vst [vmem:[#allocation5 + $0x870] sm:$0xff] %v1281
    %1586 = vst [vmem:[#allocation5 + $0x878] sm:$0xff] %v1282
    %1587 = vst [vmem:[#allocation5 + $0x880] sm:$0xff] %v1283
    %1588 = vst [vmem:[#allocation5 + $0x888] sm:$0xff] %v1284
    %1589 = vst [vmem:[#allocation5 + $0x890] sm:$0xff] %v1285
    %1590 = vst [vmem:[#allocation5 + $0x898] sm:$0xff] %v1286
    %1591 = vst [vmem:[#allocation5 + $0x8a0] sm:$0xff] %v1287
    %1592 = vst [vmem:[#allocation5 + $0x8a8] sm:$0xff] %v1288
    %1593 = vst [vmem:[#allocation5 + $0x8b0] sm:$0xff] %v1289
    %1594 = vst [vmem:[#allocation5 + $0x8b8] sm:$0xff] %v1290
    %1595 = vst [vmem:[#allocation5 + $0x8c0] sm:$0xff] %v1291
    %1596 = vst [vmem:[#allocation5 + $0x8c8] sm:$0xff] %v1292
    %1597 = vst [vmem:[#allocation5 + $0x8d0] sm:$0xff] %v1293
    %1598 = vst [vmem:[#allocation5 + $0x8d8] sm:$0xff] %v1294
    %1599 = vst [vmem:[#allocation5 + $0x8e0] sm:$0xff] %v1295
    %1600 = vst [vmem:[#allocation5 + $0x8e8] sm:$0xff] %v1296
    %1601 = vst [vmem:[#allocation5 + $0x8f0] sm:$0xff] %v1297
    %1602 = vst [vmem:[#allocation5 + $0x8f8] sm:$0xff] %v1298
    %1603 = vst [vmem:[#allocation5 + $0x900] sm:$0x7] %v1299
    %1604 = vst [vmem:[#allocation5 + $0x908] sm:$0x7] %v1300
    %1605 = vst [vmem:[#allocation5 + $0x910] sm:$0x7] %v1301
    %1606 = vst [vmem:[#allocation5 + $0x918] sm:$0x7] %v1302
    %1607 = vst [vmem:[#allocation5 + $0x920] sm:$0x7] %v1303
    %1608 = vst [vmem:[#allocation5 + $0x928] sm:$0x7] %v1304
    %1609 = vst [vmem:[#allocation5 + $0x930] sm:$0x7] %v1305
    %1610 = vst [vmem:[#allocation5 + $0x938] sm:$0x7] %v1306
    %1611 = vst [vmem:[#allocation5 + $0x940] sm:$0x7] %v1307
    %1612 = vst [vmem:[#allocation5 + $0x948] sm:$0x7] %v1308
    %1613 = vst [vmem:[#allocation5 + $0x950] sm:$0x7] %v1309
    %1614 = vst [vmem:[#allocation5 + $0x958] sm:$0x7] %v1310
    %1615 = vst [vmem:[#allocation5 + $0x960] sm:$0x7] %v1311
    %1616 = vst [vmem:[#allocation5 + $0x968] sm:$0x7] %v1312
    %1617 = vst [vmem:[#allocation5 + $0x970] sm:$0x7] %v1313
    %1618 = vst [vmem:[#allocation5 + $0x978] sm:$0x7] %v1314
    // Predicated region
    $region10: #{tpu_custom_call.1} parent=1 // pred_check
      _
    $region11: #{tpu_custom_call.1} parent=1 // pred_check_branch
      %1620 = sbr.rel (0) target = $region13
    $region12: #{tpu_custom_call.1} parent=1 // pred_region
      %s1622 = ssub.s32 38912, 38912
      %1623 = vsyncadd [#allocation4], %s1622
      %s1624 = sshll.u32 [#allocation5], 4
      %s1625 = int_to_ptr.vmem [resolvable:$true] %s1624
      %1630 = dma.vmem_to_hbm [thread:$0]  %s1625, 38912, %s1, [#allocation4], 2048, 2048, 128
    $region13: #{tpu_custom_call.1} parent=1 // pred_fallthru
      _
    // Predicated region
    $region14: #{tpu_custom_call.1} parent=1 // pred_check
      _
    $region15: #{tpu_custom_call.1} parent=1 // pred_check_branch
      %1632 = sbr.rel (0) target = $region17
    $region16: #{tpu_custom_call.1} parent=1 // pred_region
      %1633 = dma.done [#allocation4], 38912
    $region17: #{tpu_custom_call.1} parent=1 // pred_fallthru
      _
    %1634 = vsyncpa [#allocation3], 1
    %1635 = vsyncpa [#allocation4], 1

</llo_original>
